<compile_context>
chip_gen: v7x
topology: tpu7x:2x2x1
jax: 0.10.0
libtpu: 0.0.40
codegen_flags: <defaults>
</compile_context>

<pallas_src>
import functools

import jax
import jax.numpy as jnp
import numpy as np
from jax import lax
from jax.experimental import pallas as pl
from jax.experimental.pallas import tpu as pltpu


# -----------------------------------------------------------------------------
# Kernel 1: per-prior background loss + label-smoothed cross entropy.
# confidence arrives as (B, C, P): priors on lanes, classes on sublanes.
# -----------------------------------------------------------------------------
def per_prior_kernel(conf_ref, labels_ref, mbg_ref, ce_ref, *,
                     p_orig, p_tile, smooth_eps):
    conf = conf_ref[...].astype(jnp.float32)        # (B, C, T)
    labels = labels_ref[...]                        # (B, T) int32
    B, C, T = conf.shape

    # log_softmax over the class (sublane) axis.
    m = jnp.max(conf, axis=1, keepdims=True)        # (B, 1, T)
    z = conf - m
    lse = jnp.log(jnp.sum(jnp.exp(z), axis=1, keepdims=True))    # (B, 1, T)
    log_probs = z - lse                             # (B, C, T)

    bg_loss = -log_probs[:, 0, :]                   # (B, T)  background NLL (>= 0)

    # Label-smoothed CE per prior (no f32 onehot temporary).
    cls_iota = lax.broadcasted_iota(jnp.int32, (B, C, T), 1)
    log_p_true = jnp.sum(
        jnp.where(cls_iota == labels[:, None, :], log_probs, 0.0), axis=1)    # (B, T)
    sum_log_p = jnp.sum(z, axis=1) - jnp.float32(C) * lse[:, 0, :]            # (B, T)
    ce = -((1.0 - smooth_eps) * log_p_true + (smooth_eps / C) * sum_log_p)

    # Positives and padded priors are excluded from the negative pool via -inf;
    # padded priors additionally get CE = 0 so they can never contribute.
    lane = lax.broadcasted_iota(jnp.int32, (B, T), 1) + pl.program_id(0) * p_tile
    valid = lane < p_orig
    pos = labels > 0
    neg_inf = jnp.float32(-jnp.inf)
    mbg_ref[...] = jnp.where(pos | jnp.logical_not(valid), neg_inf, bg_loss)
    ce_ref[...] = jnp.where(valid, ce, 0.0)


# -----------------------------------------------------------------------------
# Kernel 2: hard-negative mining via per-row threshold search + in-kernel CE sum.
# -----------------------------------------------------------------------------
def mining_kernel(num_neg_ref, mbg_ref, ce_ref, out_ref):
    num_neg = num_neg_ref[0]                        # scalar int32 (SMEM)
    ml = mbg_ref[...]                               # (Bt, P_pad) f32 mining loss rows
    Bt = ml.shape[0]

    # Order-preserving map f32 -> int32.  Finite background losses are >= 0 (bits >= 0);
    # -inf (positives / padding) maps to -1 so it is never counted as a negative candidate.
    bits = pltpu.bitcast(ml, jnp.int32)
    key = jnp.where(bits < 0, bits ^ jnp.int32(0x7FFFFFFF), bits)
    key = jnp.maximum(key, jnp.int32(-1))

    # Per-row maximum threshold T in [0, 2^31) with count(key >= T) >= num_neg, found by a
    # monotone MSB-first bit search (31 statically-unrolled steps, each one (Bt,P) compare +
    # per-row reduce).  If no such T exists (num_neg > #negatives) the threshold stays 0 and
    # all finite negatives are selected; if num_neg == 0 the threshold saturates and nothing
    # is selected — both match the torch semantics.
    prefix = jnp.zeros((Bt, 1), jnp.int32)
    for b in range(30, -1, -1):
        cand = prefix | jnp.int32(1 << b)                                    # (Bt, 1)
        cnt = jnp.sum((key >= cand).astype(jnp.int32), axis=1, keepdims=True)
        prefix = jnp.where(cnt >= num_neg, cand, prefix)

    # -inf rows are positives (always selected) or padding (CE == 0, harmless).
    selected = (ml == jnp.float32(-jnp.inf)) | (key >= prefix)
    total = jnp.sum(jnp.where(selected, ce_ref[...], 0.0))

    # Emit one (8,128)-aligned partial-sum block per batch tile (value in [0,0]).
    sub = lax.broadcasted_iota(jnp.int32, (8, 128), 0)
    lane = lax.broadcasted_iota(jnp.int32, (8, 128), 1)
    out_ref[...] = jnp.where((sub == 0) & (lane == 0), total, jnp.float32(0.0))


# -----------------------------------------------------------------------------
# Wrapper matching MultiBoxLossV2.forward.
# -----------------------------------------------------------------------------
def multibox_loss_v2(confidence, locations, target_confidence, target_locations,
                     *, neg_pos_ratio=3, center_variance=0.1, size_variance=0.2,
                     smooth_eps=0.1, p_tile=1024, b_tile=None):
    """locations / target_locations do not affect the returned value (only the positive-prior
    count, derived from target_confidence, is used), faithful to the reference module.
    NOTE: num_pos == 0 yields a non-finite loss, exactly like the torch reference."""
    del locations, target_locations, center_variance, size_variance
    B, P, C = confidence.shape
    assert p_tile % 128 == 0, "p_tile must be a multiple of 128"

    labels = target_confidence.astype(jnp.int32)

    # Pad the prior axis to a tile multiple (padded priors are masked inside kernel 1).
    p_pad = ((P + p_tile - 1) // p_tile) * p_tile
    if p_pad != P:
        conf_p = jnp.pad(confidence, ((0, 0), (0, p_pad - P), (0, 0)))
        labels = jnp.pad(labels, ((0, 0), (0, p_pad - P)))
    else:
        conf_p = confidence

    # Single wrapper-side materialization: pad fuses into this transpose copy; no separate
    # astype pass (kernel 1 casts per tile).  Priors land on the 128-lane axis.
    conf_t = jnp.transpose(conf_p, (0, 2, 1))        # (B, C, p_pad)

    # Batch-wide positive count (torch semantics); num_neg is scalar-prefetched into SMEM.
    num_pos = jnp.sum((target_confidence > 0).astype(jnp.int32))
    num_neg = (num_pos * jnp.int32(neg_pos_ratio)).reshape((1,))

    n_pt = p_pad // p_tile

    # ---- Kernel 1: per-prior losses, tiled + pipelined over prior tiles ----
    kern1 = functools.partial(per_prior_kernel, p_orig=P, p_tile=p_tile,
                              smooth_eps=float(smooth_eps))
    mining_loss, ce = pl.pallas_call(
        kern1,
        out_shape=(jax.ShapeDtypeStruct((B, p_pad), jnp.float32),
                   jax.ShapeDtypeStruct((B, p_pad), jnp.float32)),
        grid_spec=pltpu.PrefetchScalarGridSpec(
            num_scalar_prefetch=0,
            grid=(n_pt,),
            in_specs=[
                pl.BlockSpec((B, C, p_tile), lambda i: (0, 0, i)),
                pl.BlockSpec((B, p_tile), lambda i: (0, i)),
            ],
            out_specs=(
                pl.BlockSpec((B, p_tile), lambda i: (0, i)),
                pl.BlockSpec((B, p_tile), lambda i: (0, i)),
            )),
        compiler_params=pltpu.CompilerParams(
            dimension_semantics=("parallel",),
            vmem_limit_bytes=32 * 1024 * 1024),
    )(conf_t, labels)

    # ---- Kernel 2: per-row threshold mining + in-kernel selected-CE accumulation ----
    if b_tile is None:
        b_tile = 8 if (B % 8 == 0) else B
    assert B % b_tile == 0
    n_bt = B // b_tile

    partials = pl.pallas_call(
        mining_kernel,
        out_shape=jax.ShapeDtypeStruct((n_bt * 8, 128), jnp.float32),
        grid_spec=pltpu.PrefetchScalarGridSpec(
            num_scalar_prefetch=1,
            grid=(n_bt,),
            in_specs=[
                pl.BlockSpec((b_tile, p_pad), lambda b, nneg: (b, 0)),
                pl.BlockSpec((b_tile, p_pad), lambda b, nneg: (b, 0)),
            ],
            out_specs=pl.BlockSpec((8, 128), lambda b, nneg: (b, 0))),
        compiler_params=pltpu.CompilerParams(
            dimension_semantics=("parallel",),
            vmem_limit_bytes=16 * 1024 * 1024),
    )(num_neg, mining_loss, ce)

    # Tiny final reduction + normalization in the wrapper (matches torch: / num_pos).
    return jnp.sum(partials) / num_pos.astype(jnp.float32)


def reference_loss(confidence, target_confidence, neg_pos_ratio=3, smooth_eps=0.1):
    """Pure NumPy reference mirroring the PyTorch semantics."""
    conf = np.asarray(confidence, dtype=np.float64)
    labels = np.asarray(target_confidence)
    B, P, C = conf.shape
    m = conf.max(-1, keepdims=True)
    z = conf - m
    log_probs = z - np.log(np.exp(z).sum(-1, keepdims=True))
    bg_loss = -log_probs[:, :, 0]
    pos_mask = labels > 0
    num_pos = int(pos_mask.sum())
    num_neg = num_pos * neg_pos_ratio
    masked_loss = np.where(pos_mask, -np.inf, bg_loss)
    order = np.argsort(-masked_loss, axis=1, kind="stable")
    ranks = np.empty_like(order)
    rows = np.arange(B)[:, None]
    ranks[rows, order] = np.arange(P)[None, :]
    neg_mask = ranks < num_neg
    final_mask = pos_mask | neg_mask
    onehot = np.eye(C)[labels]
    smooth = onehot * (1.0 - smooth_eps) + smooth_eps / C
    ce = -(smooth * log_probs).sum(-1)
    total = (ce * final_mask).sum()
    return total / num_pos


if __name__ == "__main__":
    key = jax.random.PRNGKey(0)
    # Small self-test (real SSD is e.g. B=32, P=8732, C=21).  P=200 exercises the
    # prior-axis padding path; p_tile=128 exercises the multi-tile kernel-1 grid.
    B, P, C = 2, 200, 8
    k1, k2, k3, k4, k5 = jax.random.split(key, 5)

    confidence = jax.random.normal(k1, (B, P, C), jnp.float32)
    locations = jax.random.normal(k2, (B, P, 4), jnp.float32)
    raw_labels = jax.random.randint(k3, (B, P), 1, C, jnp.int32)
    keep = jax.random.uniform(k4, (B, P)) < 0.05          # ~5% positive priors
    target_confidence = jnp.where(keep, raw_labels, 0).astype(jnp.int32)
    # Guarantee a few positives (avoids the num_pos==0 hazard the torch reference shares).
    target_confidence = target_confidence.at[:, :3].set(
        jnp.arange(1, 4, dtype=jnp.int32)[None, :])
    target_locations = jax.random.normal(k5, (B, P, 4), jnp.float32)

    loss_fn = jax.jit(functools.partial(
        multibox_loss_v2, neg_pos_ratio=3, smooth_eps=0.1, p_tile=128))
    out = loss_fn(confidence, locations, target_confidence, target_locations)
    out = jax.block_until_ready(out)

    ref = reference_loss(np.asarray(confidence), np.asarray(target_confidence),
                         neg_pos_ratio=3, smooth_eps=0.1)
    assert np.isfinite(float(out)), "kernel produced non-finite loss"
    np.testing.assert_allclose(float(out), float(ref), rtol=1e-4, atol=1e-4)
    print("KERNEL_OK")
</pallas_src>

<mosaic_0001>
module attributes {stable_mosaic.version = 11 : i64} {
  func.func @per_prior_kernel(%arg0: i32, %arg1: memref<2x8x128xf32, #tpu.memory_space<vmem>>, %arg2: memref<2x128xi32, #tpu.memory_space<vmem>>, %arg3: memref<2x128xf32, #tpu.memory_space<vmem>>, %arg4: memref<2x128xf32, #tpu.memory_space<vmem>>) attributes {dimension_semantics = [#tpu.dimension_semantics<parallel>], iteration_bounds = array<i64: 2>, scalar_prefetch = 0 : i64, scratch_operands = 0 : i64, tpu.core_type = #tpu.core_type<tc>, window_params = [{transform_indices = @transform_0, window_bounds = array<i64: 2, 8, 128>}, {transform_indices = @transform_1, window_bounds = array<i64: 2, 128>}, {transform_indices = @transform_2, window_bounds = array<i64: 2, 128>}, {transform_indices = @transform_3, window_bounds = array<i64: 2, 128>}]} {
    %c0 = arith.constant 0 : index
    %c0_0 = arith.constant 0 : index
    %c0_1 = arith.constant 0 : index
    %0 = vector.load %arg1[%c0, %c0_0, %c0_1] : memref<2x8x128xf32, #tpu.memory_space<vmem>>, vector<2x8x128xf32>
    %c0_2 = arith.constant 0 : index
    %c0_3 = arith.constant 0 : index
    %1 = vector.load %arg2[%c0_2, %c0_3] : memref<2x128xi32, #tpu.memory_space<vmem>>, vector<2x128xi32>
    %cst = arith.constant dense<0xFF800000> : vector<2x128xf32>
    %2 = vector.multi_reduction <maximumf>, %0, %cst [1] : vector<2x8x128xf32> to vector<2x128xf32>
    %3 = vector.shape_cast %2 : vector<2x128xf32> to vector<2x1x128xf32>
    %4 = vector.broadcast %3 : vector<2x1x128xf32> to vector<2x8x128xf32>
    %5 = arith.subf %0, %4 : vector<2x8x128xf32>
    %6 = math.exp %5 : vector<2x8x128xf32>
    %cst_4 = arith.constant dense<0.000000e+00> : vector<2x128xf32>
    %7 = vector.multi_reduction <add>, %6, %cst_4 [1] : vector<2x8x128xf32> to vector<2x128xf32>
    %8 = vector.shape_cast %7 : vector<2x128xf32> to vector<2x1x128xf32>
    %9 = math.log %8 : vector<2x1x128xf32>
    %10 = vector.broadcast %9 : vector<2x1x128xf32> to vector<2x8x128xf32>
    %11 = arith.subf %5, %10 : vector<2x8x128xf32>
    %12 = vector.extract_strided_slice %11 {offsets = [0, 0, 0], sizes = [2, 1, 128], strides = [1, 1, 1]} : vector<2x8x128xf32> to vector<2x1x128xf32>
    %13 = vector.shape_cast %12 : vector<2x1x128xf32> to vector<2x128xf32>
    %cst_5 = arith.constant 0.000000e+00 : f32
    %14 = vector.broadcast %cst_5 : f32 to vector<2x128xf32>
    %15 = arith.subf %14, %13 : vector<2x128xf32>
    %16 = tpu.iota {dimensions = array<i32: 1>} : vector<2x8x128xi32>
    %17 = vector.shape_cast %1 : vector<2x128xi32> to vector<2x1x128xi32>
    %18 = vector.broadcast %17 : vector<2x1x128xi32> to vector<2x8x128xi32>
    %19 = arith.cmpi eq, %16, %18 : vector<2x8x128xi32>
    %cst_6 = arith.constant 0.000000e+00 : f32
    %20 = vector.broadcast %cst_6 : f32 to vector<2x8x128xf32>
    %21 = arith.select %19, %11, %20 : vector<2x8x128xi1>, vector<2x8x128xf32>
    %cst_7 = arith.constant dense<0.000000e+00> : vector<2x128xf32>
    %22 = vector.multi_reduction <add>, %21, %cst_7 [1] : vector<2x8x128xf32> to vector<2x128xf32>
    %cst_8 = arith.constant dense<0.000000e+00> : vector<2x128xf32>
    %23 = vector.multi_reduction <add>, %5, %cst_8 [1] : vector<2x8x128xf32> to vector<2x128xf32>
    %24 = vector.shape_cast %9 : vector<2x1x128xf32> to vector<2x128xf32>
    %cst_9 = arith.constant 8.000000e+00 : f32
    %25 = vector.broadcast %cst_9 : f32 to vector<2x128xf32>
    %26 = arith.mulf %25, %24 : vector<2x128xf32>
    %27 = arith.subf %23, %26 : vector<2x128xf32>
    %cst_10 = arith.constant 0.899999976 : f32
    %28 = vector.broadcast %cst_10 : f32 to vector<2x128xf32>
    %29 = arith.mulf %28, %22 : vector<2x128xf32>
    %cst_11 = arith.constant 1.250000e-02 : f32
    %30 = vector.broadcast %cst_11 : f32 to vector<2x128xf32>
    %31 = arith.mulf %30, %27 : vector<2x128xf32>
    %32 = arith.addf %29, %31 : vector<2x128xf32>
    %cst_12 = arith.constant 0.000000e+00 : f32
    %33 = vector.broadcast %cst_12 : f32 to vector<2x128xf32>
    %34 = arith.subf %33, %32 : vector<2x128xf32>
    %35 = tpu.iota {dimensions = array<i32: 1>} : vector<2x128xi32>
    %c128_i32 = arith.constant 128 : i32
    %36 = arith.muli %arg0, %c128_i32 : i32
    %37 = vector.broadcast %36 : i32 to vector<2x128xi32>
    %38 = arith.addi %35, %37 : vector<2x128xi32>
    %c200_i32 = arith.constant 200 : i32
    %39 = vector.broadcast %c200_i32 : i32 to vector<2x128xi32>
    %40 = arith.cmpi slt, %38, %39 : vector<2x128xi32>
    %c0_i32 = arith.constant 0 : i32
    %41 = vector.broadcast %c0_i32 : i32 to vector<2x128xi32>
    %42 = arith.cmpi sgt, %1, %41 : vector<2x128xi32>
    %cst_13 = arith.constant dense<true> : vector<2x128xi1>
    %43 = arith.xori %40, %cst_13 : vector<2x128xi1>
    %44 = arith.ori %42, %43 : vector<2x128xi1>
    %cst_14 = arith.constant 0xFF800000 : f32
    %45 = vector.broadcast %cst_14 : f32 to vector<2x128xf32>
    %46 = arith.select %44, %45, %15 : vector<2x128xi1>, vector<2x128xf32>
    %c0_15 = arith.constant 0 : index
    %c0_16 = arith.constant 0 : index
    %47 = vector.load %arg3[%c0_15, %c0_16] : memref<2x128xf32, #tpu.memory_space<vmem>>, vector<2x128xf32>
    tpu.vector_store %arg3[%c0_15, %c0_16], %46 {strides = array<i32>} : memref<2x128xf32, #tpu.memory_space<vmem>>, vector<2x128xf32>,
    %cst_17 = arith.constant 0.000000e+00 : f32
    %48 = vector.broadcast %cst_17 : f32 to vector<2x128xf32>
    %49 = arith.select %40, %34, %48 : vector<2x128xi1>, vector<2x128xf32>
    %c0_18 = arith.constant 0 : index
    %c0_19 = arith.constant 0 : index
    %50 = vector.load %arg4[%c0_18, %c0_19] : memref<2x128xf32, #tpu.memory_space<vmem>>, vector<2x128xf32>
    tpu.vector_store %arg4[%c0_18, %c0_19], %49 {strides = array<i32>} : memref<2x128xf32, #tpu.memory_space<vmem>>, vector<2x128xf32>,
    return
  }
  func.func @transform_0(%arg0: i32) -> (i32, i32, i32) {
    %c0_i32 = arith.constant 0 : i32
    %c0_i32_0 = arith.constant 0 : i32
    %c0_i32_1 = arith.constant 0 : i32
    return %c0_i32, %c0_i32_0, %arg0 : i32, i32, i32
  }
  func.func @transform_1(%arg0: i32) -> (i32, i32) {
    %c0_i32 = arith.constant 0 : i32
    %c0_i32_0 = arith.constant 0 : i32
    return %c0_i32, %arg0 : i32, i32
  }
  func.func @transform_2(%arg0: i32) -> (i32, i32) {
    %c0_i32 = arith.constant 0 : i32
    %c0_i32_0 = arith.constant 0 : i32
    return %c0_i32, %arg0 : i32, i32
  }
  func.func @transform_3(%arg0: i32) -> (i32, i32) {
    %c0_i32 = arith.constant 0 : i32
    %c0_i32_0 = arith.constant 0 : i32
    return %c0_i32, %arg0 : i32, i32
  }
}

module attributes {stable_mosaic.version = 11 : i64} {
  func.func @mining_kernel(%arg0: i32, %arg1: memref<1xi32, #tpu.memory_space<smem>>, %arg2: memref<2x256xf32, #tpu.memory_space<vmem>>, %arg3: memref<2x256xf32, #tpu.memory_space<vmem>>, %arg4: memref<8x128xf32, #tpu.memory_space<vmem>>) attributes {dimension_semantics = [#tpu.dimension_semantics<parallel>], iteration_bounds = array<i64: 1>, scalar_prefetch = 1 : i64, scratch_operands = 0 : i64, tpu.core_type = #tpu.core_type<tc>, window_params = [{transform_indices = @transform_0, window_bounds = array<i64: 2, 256>}, {transform_indices = @transform_1, window_bounds = array<i64: 2, 256>}, {transform_indices = @transform_2, window_bounds = array<i64: 8, 128>}]} {
    %c0 = arith.constant 0 : index
    %0 = memref.load %arg1[%c0] : memref<1xi32, #tpu.memory_space<smem>>
    %c0_0 = arith.constant 0 : index
    %c0_1 = arith.constant 0 : index
    %1 = vector.load %arg2[%c0_0, %c0_1] : memref<2x256xf32, #tpu.memory_space<vmem>>, vector<2x256xf32>
    %2 = tpu.bitcast %1 : vector<2x256xf32> -> vector<2x256xi32>
    %c0_i32 = arith.constant 0 : i32
    %3 = vector.broadcast %c0_i32 : i32 to vector<2x256xi32>
    %4 = arith.cmpi slt, %2, %3 : vector<2x256xi32>
    %c2147483647_i32 = arith.constant 2147483647 : i32
    %5 = vector.broadcast %c2147483647_i32 : i32 to vector<2x256xi32>
    %6 = arith.xori %2, %5 : vector<2x256xi32>
    %7 = arith.select %4, %6, %2 : vector<2x256xi1>, vector<2x256xi32>
    %c-1_i32 = arith.constant -1 : i32
    %8 = vector.broadcast %c-1_i32 : i32 to vector<2x256xi32>
    %9 = arith.maxsi %7, %8 : vector<2x256xi32>
    %c0_i32_2 = arith.constant 0 : i32
    %10 = vector.broadcast %c0_i32_2 : i32 to vector<2x1xi32>
    %c1073741824_i32 = arith.constant 1073741824 : i32
    %11 = vector.broadcast %c1073741824_i32 : i32 to vector<2x1xi32>
    %12 = arith.ori %10, %11 : vector<2x1xi32>
    %13 = vector.broadcast %12 : vector<2x1xi32> to vector<2x256xi32>
    %14 = arith.cmpi sge, %9, %13 : vector<2x256xi32>
    %15 = arith.extui %14 : vector<2x256xi1> to vector<2x256xi32>
    %cst = arith.constant dense<0> : vector<2xi32>
    %16 = vector.multi_reduction <add>, %15, %cst [1] : vector<2x256xi32> to vector<2xi32>
    %17 = vector.shape_cast %16 : vector<2xi32> to vector<2x1xi32>
    %18 = vector.broadcast %0 : i32 to vector<2x1xi32>
    %19 = arith.cmpi sge, %17, %18 : vector<2x1xi32>
    %20 = arith.select %19, %12, %10 : vector<2x1xi1>, vector<2x1xi32>
    %c536870912_i32 = arith.constant 536870912 : i32
    %21 = vector.broadcast %c536870912_i32 : i32 to vector<2x1xi32>
    %22 = arith.ori %20, %21 : vector<2x1xi32>
    %23 = vector.broadcast %22 : vector<2x1xi32> to vector<2x256xi32>
    %24 = arith.cmpi sge, %9, %23 : vector<2x256xi32>
    %25 = arith.extui %24 : vector<2x256xi1> to vector<2x256xi32>
    %cst_3 = arith.constant dense<0> : vector<2xi32>
    %26 = vector.multi_reduction <add>, %25, %cst_3 [1] : vector<2x256xi32> to vector<2xi32>
    %27 = vector.shape_cast %26 : vector<2xi32> to vector<2x1xi32>
    %28 = vector.broadcast %0 : i32 to vector<2x1xi32>
    %29 = arith.cmpi sge, %27, %28 : vector<2x1xi32>
    %30 = arith.select %29, %22, %20 : vector<2x1xi1>, vector<2x1xi32>
    %c268435456_i32 = arith.constant 268435456 : i32
    %31 = vector.broadcast %c268435456_i32 : i32 to vector<2x1xi32>
    %32 = arith.ori %30, %31 : vector<2x1xi32>
    %33 = vector.broadcast %32 : vector<2x1xi32> to vector<2x256xi32>
    %34 = arith.cmpi sge, %9, %33 : vector<2x256xi32>
    %35 = arith.extui %34 : vector<2x256xi1> to vector<2x256xi32>
    %cst_4 = arith.constant dense<0> : vector<2xi32>
    %36 = vector.multi_reduction <add>, %35, %cst_4 [1] : vector<2x256xi32> to vector<2xi32>
    %37 = vector.shape_cast %36 : vector<2xi32> to vector<2x1xi32>
    %38 = vector.broadcast %0 : i32 to vector<2x1xi32>
    %39 = arith.cmpi sge, %37, %38 : vector<2x1xi32>
    %40 = arith.select %39, %32, %30 : vector<2x1xi1>, vector<2x1xi32>
    %c134217728_i32 = arith.constant 134217728 : i32
    %41 = vector.broadcast %c134217728_i32 : i32 to vector<2x1xi32>
    %42 = arith.ori %40, %41 : vector<2x1xi32>
    %43 = vector.broadcast %42 : vector<2x1xi32> to vector<2x256xi32>
    %44 = arith.cmpi sge, %9, %43 : vector<2x256xi32>
    %45 = arith.extui %44 : vector<2x256xi1> to vector<2x256xi32>
    %cst_5 = arith.constant dense<0> : vector<2xi32>
    %46 = vector.multi_reduction <add>, %45, %cst_5 [1] : vector<2x256xi32> to vector<2xi32>
    %47 = vector.shape_cast %46 : vector<2xi32> to vector<2x1xi32>
    %48 = vector.broadcast %0 : i32 to vector<2x1xi32>
    %49 = arith.cmpi sge, %47, %48 : vector<2x1xi32>
    %50 = arith.select %49, %42, %40 : vector<2x1xi1>, vector<2x1xi32>
    %c67108864_i32 = arith.constant 67108864 : i32
    %51 = vector.broadcast %c67108864_i32 : i32 to vector<2x1xi32>
    %52 = arith.ori %50, %51 : vector<2x1xi32>
    %53 = vector.broadcast %52 : vector<2x1xi32> to vector<2x256xi32>
    %54 = arith.cmpi sge, %9, %53 : vector<2x256xi32>
    %55 = arith.extui %54 : vector<2x256xi1> to vector<2x256xi32>
    %cst_6 = arith.constant dense<0> : vector<2xi32>
    %56 = vector.multi_reduction <add>, %55, %cst_6 [1] : vector<2x256xi32> to vector<2xi32>
    %57 = vector.shape_cast %56 : vector<2xi32> to vector<2x1xi32>
    %58 = vector.broadcast %0 : i32 to vector<2x1xi32>
    %59 = arith.cmpi sge, %57, %58 : vector<2x1xi32>
    %60 = arith.select %59, %52, %50 : vector<2x1xi1>, vector<2x1xi32>
    %c33554432_i32 = arith.constant 33554432 : i32
    %61 = vector.broadcast %c33554432_i32 : i32 to vector<2x1xi32>
    %62 = arith.ori %60, %61 : vector<2x1xi32>
    %63 = vector.broadcast %62 : vector<2x1xi32> to vector<2x256xi32>
    %64 = arith.cmpi sge, %9, %63 : vector<2x256xi32>
    %65 = arith.extui %64 : vector<2x256xi1> to vector<2x256xi32>
    %cst_7 = arith.constant dense<0> : vector<2xi32>
    %66 = vector.multi_reduction <add>, %65, %cst_7 [1] : vector<2x256xi32> to vector<2xi32>
    %67 = vector.shape_cast %66 : vector<2xi32> to vector<2x1xi32>
    %68 = vector.broadcast %0 : i32 to vector<2x1xi32>
    %69 = arith.cmpi sge, %67, %68 : vector<2x1xi32>
    %70 = arith.select %69, %62, %60 : vector<2x1xi1>, vector<2x1xi32>
    %c16777216_i32 = arith.constant 16777216 : i32
    %71 = vector.broadcast %c16777216_i32 : i32 to vector<2x1xi32>
    %72 = arith.ori %70, %71 : vector<2x1xi32>
    %73 = vector.broadcast %72 : vector<2x1xi32> to vector<2x256xi32>
    %74 = arith.cmpi sge, %9, %73 : vector<2x256xi32>
    %75 = arith.extui %74 : vector<2x256xi1> to vector<2x256xi32>
    %cst_8 = arith.constant dense<0> : vector<2xi32>
    %76 = vector.multi_reduction <add>, %75, %cst_8 [1] : vector<2x256xi32> to vector<2xi32>
    %77 = vector.shape_cast %76 : vector<2xi32> to vector<2x1xi32>
    %78 = vector.broadcast %0 : i32 to vector<2x1xi32>
    %79 = arith.cmpi sge, %77, %78 : vector<2x1xi32>
    %80 = arith.select %79, %72, %70 : vector<2x1xi1>, vector<2x1xi32>
    %c8388608_i32 = arith.constant 8388608 : i32
    %81 = vector.broadcast %c8388608_i32 : i32 to vector<2x1xi32>
    %82 = arith.ori %80, %81 : vector<2x1xi32>
    %83 = vector.broadcast %82 : vector<2x1xi32> to vector<2x256xi32>
    %84 = arith.cmpi sge, %9, %83 : vector<2x256xi32>
    %85 = arith.extui %84 : vector<2x256xi1> to vector<2x256xi32>
    %cst_9 = arith.constant dense<0> : vector<2xi32>
    %86 = vector.multi_reduction <add>, %85, %cst_9 [1] : vector<2x256xi32> to vector<2xi32>
    %87 = vector.shape_cast %86 : vector<2xi32> to vector<2x1xi32>
    %88 = vector.broadcast %0 : i32 to vector<2x1xi32>
    %89 = arith.cmpi sge, %87, %88 : vector<2x1xi32>
    %90 = arith.select %89, %82, %80 : vector<2x1xi1>, vector<2x1xi32>
    %c4194304_i32 = arith.constant 4194304 : i32
    %91 = vector.broadcast %c4194304_i32 : i32 to vector<2x1xi32>
    %92 = arith.ori %90, %91 : vector<2x1xi32>
    %93 = vector.broadcast %92 : vector<2x1xi32> to vector<2x256xi32>
    %94 = arith.cmpi sge, %9, %93 : vector<2x256xi32>
    %95 = arith.extui %94 : vector<2x256xi1> to vector<2x256xi32>
    %cst_10 = arith.constant dense<0> : vector<2xi32>
    %96 = vector.multi_reduction <add>, %95, %cst_10 [1] : vector<2x256xi32> to vector<2xi32>
    %97 = vector.shape_cast %96 : vector<2xi32> to vector<2x1xi32>
    %98 = vector.broadcast %0 : i32 to vector<2x1xi32>
    %99 = arith.cmpi sge, %97, %98 : vector<2x1xi32>
    %100 = arith.select %99, %92, %90 : vector<2x1xi1>, vector<2x1xi32>
    %c2097152_i32 = arith.constant 2097152 : i32
    %101 = vector.broadcast %c2097152_i32 : i32 to vector<2x1xi32>
    %102 = arith.ori %100, %101 : vector<2x1xi32>
    %103 = vector.broadcast %102 : vector<2x1xi32> to vector<2x256xi32>
    %104 = arith.cmpi sge, %9, %103 : vector<2x256xi32>
    %105 = arith.extui %104 : vector<2x256xi1> to vector<2x256xi32>
    %cst_11 = arith.constant dense<0> : vector<2xi32>
    %106 = vector.multi_reduction <add>, %105, %cst_11 [1] : vector<2x256xi32> to vector<2xi32>
    %107 = vector.shape_cast %106 : vector<2xi32> to vector<2x1xi32>
    %108 = vector.broadcast %0 : i32 to vector<2x1xi32>
    %109 = arith.cmpi sge, %107, %108 : vector<2x1xi32>
    %110 = arith.select %109, %102, %100 : vector<2x1xi1>, vector<2x1xi32>
    %c1048576_i32 = arith.constant 1048576 : i32
    %111 = vector.broadcast %c1048576_i32 : i32 to vector<2x1xi32>
    %112 = arith.ori %110, %111 : vector<2x1xi32>
    %113 = vector.broadcast %112 : vector<2x1xi32> to vector<2x256xi32>
    %114 = arith.cmpi sge, %9, %113 : vector<2x256xi32>
    %115 = arith.extui %114 : vector<2x256xi1> to vector<2x256xi32>
    %cst_12 = arith.constant dense<0> : vector<2xi32>
    %116 = vector.multi_reduction <add>, %115, %cst_12 [1] : vector<2x256xi32> to vector<2xi32>
    %117 = vector.shape_cast %116 : vector<2xi32> to vector<2x1xi32>
    %118 = vector.broadcast %0 : i32 to vector<2x1xi32>
    %119 = arith.cmpi sge, %117, %118 : vector<2x1xi32>
    %120 = arith.select %119, %112, %110 : vector<2x1xi1>, vector<2x1xi32>
    %c524288_i32 = arith.constant 524288 : i32
    %121 = vector.broadcast %c524288_i32 : i32 to vector<2x1xi32>
    %122 = arith.ori %120, %121 : vector<2x1xi32>
    %123 = vector.broadcast %122 : vector<2x1xi32> to vector<2x256xi32>
    %124 = arith.cmpi sge, %9, %123 : vector<2x256xi32>
    %125 = arith.extui %124 : vector<2x256xi1> to vector<2x256xi32>
    %cst_13 = arith.constant dense<0> : vector<2xi32>
    %126 = vector.multi_reduction <add>, %125, %cst_13 [1] : vector<2x256xi32> to vector<2xi32>
    %127 = vector.shape_cast %126 : vector<2xi32> to vector<2x1xi32>
    %128 = vector.broadcast %0 : i32 to vector<2x1xi32>
    %129 = arith.cmpi sge, %127, %128 : vector<2x1xi32>
    %130 = arith.select %129, %122, %120 : vector<2x1xi1>, vector<2x1xi32>
    %c262144_i32 = arith.constant 262144 : i32
    %131 = vector.broadcast %c262144_i32 : i32 to vector<2x1xi32>
    %132 = arith.ori %130, %131 : vector<2x1xi32>
    %133 = vector.broadcast %132 : vector<2x1xi32> to vector<2x256xi32>
    %134 = arith.cmpi sge, %9, %133 : vector<2x256xi32>
    %135 = arith.extui %134 : vector<2x256xi1> to vector<2x256xi32>
    %cst_14 = arith.constant dense<0> : vector<2xi32>
    %136 = vector.multi_reduction <add>, %135, %cst_14 [1] : vector<2x256xi32> to vector<2xi32>
    %137 = vector.shape_cast %136 : vector<2xi32> to vector<2x1xi32>
    %138 = vector.broadcast %0 : i32 to vector<2x1xi32>
    %139 = arith.cmpi sge, %137, %138 : vector<2x1xi32>
    %140 = arith.select %139, %132, %130 : vector<2x1xi1>, vector<2x1xi32>
    %c131072_i32 = arith.constant 131072 : i32
    %141 = vector.broadcast %c131072_i32 : i32 to vector<2x1xi32>
    %142 = arith.ori %140, %141 : vector<2x1xi32>
    %143 = vector.broadcast %142 : vector<2x1xi32> to vector<2x256xi32>
    %144 = arith.cmpi sge, %9, %143 : vector<2x256xi32>
    %145 = arith.extui %144 : vector<2x256xi1> to vector<2x256xi32>
    %cst_15 = arith.constant dense<0> : vector<2xi32>
    %146 = vector.multi_reduction <add>, %145, %cst_15 [1] : vector<2x256xi32> to vector<2xi32>
    %147 = vector.shape_cast %146 : vector<2xi32> to vector<2x1xi32>
    %148 = vector.broadcast %0 : i32 to vector<2x1xi32>
    %149 = arith.cmpi sge, %147, %148 : vector<2x1xi32>
    %150 = arith.select %149, %142, %140 : vector<2x1xi1>, vector<2x1xi32>
    %c65536_i32 = arith.constant 65536 : i32
    %151 = vector.broadcast %c65536_i32 : i32 to vector<2x1xi32>
    %152 = arith.ori %150, %151 : vector<2x1xi32>
    %153 = vector.broadcast %152 : vector<2x1xi32> to vector<2x256xi32>
    %154 = arith.cmpi sge, %9, %153 : vector<2x256xi32>
    %155 = arith.extui %154 : vector<2x256xi1> to vector<2x256xi32>
    %cst_16 = arith.constant dense<0> : vector<2xi32>
    %156 = vector.multi_reduction <add>, %155, %cst_16 [1] : vector<2x256xi32> to vector<2xi32>
    %157 = vector.shape_cast %156 : vector<2xi32> to vector<2x1xi32>
    %158 = vector.broadcast %0 : i32 to vector<2x1xi32>
    %159 = arith.cmpi sge, %157, %158 : vector<2x1xi32>
    %160 = arith.select %159, %152, %150 : vector<2x1xi1>, vector<2x1xi32>
    %c32768_i32 = arith.constant 32768 : i32
    %161 = vector.broadcast %c32768_i32 : i32 to vector<2x1xi32>
    %162 = arith.ori %160, %161 : vector<2x1xi32>
    %163 = vector.broadcast %162 : vector<2x1xi32> to vector<2x256xi32>
    %164 = arith.cmpi sge, %9, %163 : vector<2x256xi32>
    %165 = arith.extui %164 : vector<2x256xi1> to vector<2x256xi32>
    %cst_17 = arith.constant dense<0> : vector<2xi32>
    %166 = vector.multi_reduction <add>, %165, %cst_17 [1] : vector<2x256xi32> to vector<2xi32>
    %167 = vector.shape_cast %166 : vector<2xi32> to vector<2x1xi32>
    %168 = vector.broadcast %0 : i32 to vector<2x1xi32>
    %169 = arith.cmpi sge, %167, %168 : vector<2x1xi32>
    %170 = arith.select %169, %162, %160 : vector<2x1xi1>, vector<2x1xi32>
    %c16384_i32 = arith.constant 16384 : i32
    %171 = vector.broadcast %c16384_i32 : i32 to vector<2x1xi32>
    %172 = arith.ori %170, %171 : vector<2x1xi32>
    %173 = vector.broadcast %172 : vector<2x1xi32> to vector<2x256xi32>
    %174 = arith.cmpi sge, %9, %173 : vector<2x256xi32>
    %175 = arith.extui %174 : vector<2x256xi1> to vector<2x256xi32>
    %cst_18 = arith.constant dense<0> : vector<2xi32>
    %176 = vector.multi_reduction <add>, %175, %cst_18 [1] : vector<2x256xi32> to vector<2xi32>
    %177 = vector.shape_cast %176 : vector<2xi32> to vector<2x1xi32>
    %178 = vector.broadcast %0 : i32 to vector<2x1xi32>
    %179 = arith.cmpi sge, %177, %178 : vector<2x1xi32>
    %180 = arith.select %179, %172, %170 : vector<2x1xi1>, vector<2x1xi32>
    %c8192_i32 = arith.constant 8192 : i32
    %181 = vector.broadcast %c8192_i32 : i32 to vector<2x1xi32>
    %182 = arith.ori %180, %181 : vector<2x1xi32>
    %183 = vector.broadcast %182 : vector<2x1xi32> to vector<2x256xi32>
    %184 = arith.cmpi sge, %9, %183 : vector<2x256xi32>
    %185 = arith.extui %184 : vector<2x256xi1> to vector<2x256xi32>
    %cst_19 = arith.constant dense<0> : vector<2xi32>
    %186 = vector.multi_reduction <add>, %185, %cst_19 [1] : vector<2x256xi32> to vector<2xi32>
    %187 = vector.shape_cast %186 : vector<2xi32> to vector<2x1xi32>
    %188 = vector.broadcast %0 : i32 to vector<2x1xi32>
    %189 = arith.cmpi sge, %187, %188 : vector<2x1xi32>
    %190 = arith.select %189, %182, %180 : vector<2x1xi1>, vector<2x1xi32>
    %c4096_i32 = arith.constant 4096 : i32
    %191 = vector.broadcast %c4096_i32 : i32 to vector<2x1xi32>
    %192 = arith.ori %190, %191 : vector<2x1xi32>
    %193 = vector.broadcast %192 : vector<2x1xi32> to vector<2x256xi32>
    %194 = arith.cmpi sge, %9, %193 : vector<2x256xi32>
    %195 = arith.extui %194 : vector<2x256xi1> to vector<2x256xi32>
    %cst_20 = arith.constant dense<0> : vector<2xi32>
    %196 = vector.multi_reduction <add>, %195, %cst_20 [1] : vector<2x256xi32> to vector<2xi32>
    %197 = vector.shape_cast %196 : vector<2xi32> to vector<2x1xi32>
    %198 = vector.broadcast %0 : i32 to vector<2x1xi32>
    %199 = arith.cmpi sge, %197, %198 : vector<2x1xi32>
    %200 = arith.select %199, %192, %190 : vector<2x1xi1>, vector<2x1xi32>
    %c2048_i32 = arith.constant 2048 : i32
    %201 = vector.broadcast %c2048_i32 : i32 to vector<2x1xi32>
    %202 = arith.ori %200, %201 : vector<2x1xi32>
    %203 = vector.broadcast %202 : vector<2x1xi32> to vector<2x256xi32>
    %204 = arith.cmpi sge, %9, %203 : vector<2x256xi32>
    %205 = arith.extui %204 : vector<2x256xi1> to vector<2x256xi32>
    %cst_21 = arith.constant dense<0> : vector<2xi32>
    %206 = vector.multi_reduction <add>, %205, %cst_21 [1] : vector<2x256xi32> to vector<2xi32>
    %207 = vector.shape_cast %206 : vector<2xi32> to vector<2x1xi32>
    %208 = vector.broadcast %0 : i32 to vector<2x1xi32>
    %209 = arith.cmpi sge, %207, %208 : vector<2x1xi32>
    %210 = arith.select %209, %202, %200 : vector<2x1xi1>, vector<2x1xi32>
    %c1024_i32 = arith.constant 1024 : i32
    %211 = vector.broadcast %c1024_i32 : i32 to vector<2x1xi32>
    %212 = arith.ori %210, %211 : vector<2x1xi32>
    %213 = vector.broadcast %212 : vector<2x1xi32> to vector<2x256xi32>
    %214 = arith.cmpi sge, %9, %213 : vector<2x256xi32>
    %215 = arith.extui %214 : vector<2x256xi1> to vector<2x256xi32>
    %cst_22 = arith.constant dense<0> : vector<2xi32>
    %216 = vector.multi_reduction <add>, %215, %cst_22 [1] : vector<2x256xi32> to vector<2xi32>
    %217 = vector.shape_cast %216 : vector<2xi32> to vector<2x1xi32>
    %218 = vector.broadcast %0 : i32 to vector<2x1xi32>
    %219 = arith.cmpi sge, %217, %218 : vector<2x1xi32>
    %220 = arith.select %219, %212, %210 : vector<2x1xi1>, vector<2x1xi32>
    %c512_i32 = arith.constant 512 : i32
    %221 = vector.broadcast %c512_i32 : i32 to vector<2x1xi32>
    %222 = arith.ori %220, %221 : vector<2x1xi32>
    %223 = vector.broadcast %222 : vector<2x1xi32> to vector<2x256xi32>
    %224 = arith.cmpi sge, %9, %223 : vector<2x256xi32>
    %225 = arith.extui %224 : vector<2x256xi1> to vector<2x256xi32>
    %cst_23 = arith.constant dense<0> : vector<2xi32>
    %226 = vector.multi_reduction <add>, %225, %cst_23 [1] : vector<2x256xi32> to vector<2xi32>
    %227 = vector.shape_cast %226 : vector<2xi32> to vector<2x1xi32>
    %228 = vector.broadcast %0 : i32 to vector<2x1xi32>
    %229 = arith.cmpi sge, %227, %228 : vector<2x1xi32>
    %230 = arith.select %229, %222, %220 : vector<2x1xi1>, vector<2x1xi32>
    %c256_i32 = arith.constant 256 : i32
    %231 = vector.broadcast %c256_i32 : i32 to vector<2x1xi32>
    %232 = arith.ori %230, %231 : vector<2x1xi32>
    %233 = vector.broadcast %232 : vector<2x1xi32> to vector<2x256xi32>
    %234 = arith.cmpi sge, %9, %233 : vector<2x256xi32>
    %235 = arith.extui %234 : vector<2x256xi1> to vector<2x256xi32>
    %cst_24 = arith.constant dense<0> : vector<2xi32>
    %236 = vector.multi_reduction <add>, %235, %cst_24 [1] : vector<2x256xi32> to vector<2xi32>
    %237 = vector.shape_cast %236 : vector<2xi32> to vector<2x1xi32>
    %238 = vector.broadcast %0 : i32 to vector<2x1xi32>
    %239 = arith.cmpi sge, %237, %238 : vector<2x1xi32>
    %240 = arith.select %239, %232, %230 : vector<2x1xi1>, vector<2x1xi32>
    %c128_i32 = arith.constant 128 : i32
    %241 = vector.broadcast %c128_i32 : i32 to vector<2x1xi32>
    %242 = arith.ori %240, %241 : vector<2x1xi32>
    %243 = vector.broadcast %242 : vector<2x1xi32> to vector<2x256xi32>
    %244 = arith.cmpi sge, %9, %243 : vector<2x256xi32>
    %245 = arith.extui %244 : vector<2x256xi1> to vector<2x256xi32>
    %cst_25 = arith.constant dense<0> : vector<2xi32>
    %246 = vector.multi_reduction <add>, %245, %cst_25 [1] : vector<2x256xi32> to vector<2xi32>
    %247 = vector.shape_cast %246 : vector<2xi32> to vector<2x1xi32>
    %248 = vector.broadcast %0 : i32 to vector<2x1xi32>
    %249 = arith.cmpi sge, %247, %248 : vector<2x1xi32>
    %250 = arith.select %249, %242, %240 : vector<2x1xi1>, vector<2x1xi32>
    %c64_i32 = arith.constant 64 : i32
    %251 = vector.broadcast %c64_i32 : i32 to vector<2x1xi32>
    %252 = arith.ori %250, %251 : vector<2x1xi32>
    %253 = vector.broadcast %252 : vector<2x1xi32> to vector<2x256xi32>
    %254 = arith.cmpi sge, %9, %253 : vector<2x256xi32>
    %255 = arith.extui %254 : vector<2x256xi1> to vector<2x256xi32>
    %cst_26 = arith.constant dense<0> : vector<2xi32>
    %256 = vector.multi_reduction <add>, %255, %cst_26 [1] : vector<2x256xi32> to vector<2xi32>
    %257 = vector.shape_cast %256 : vector<2xi32> to vector<2x1xi32>
    %258 = vector.broadcast %0 : i32 to vector<2x1xi32>
    %259 = arith.cmpi sge, %257, %258 : vector<2x1xi32>
    %260 = arith.select %259, %252, %250 : vector<2x1xi1>, vector<2x1xi32>
    %c32_i32 = arith.constant 32 : i32
    %261 = vector.broadcast %c32_i32 : i32 to vector<2x1xi32>
    %262 = arith.ori %260, %261 : vector<2x1xi32>
    %263 = vector.broadcast %262 : vector<2x1xi32> to vector<2x256xi32>
    %264 = arith.cmpi sge, %9, %263 : vector<2x256xi32>
    %265 = arith.extui %264 : vector<2x256xi1> to vector<2x256xi32>
    %cst_27 = arith.constant dense<0> : vector<2xi32>
    %266 = vector.multi_reduction <add>, %265, %cst_27 [1] : vector<2x256xi32> to vector<2xi32>
    %267 = vector.shape_cast %266 : vector<2xi32> to vector<2x1xi32>
    %268 = vector.broadcast %0 : i32 to vector<2x1xi32>
    %269 = arith.cmpi sge, %267, %268 : vector<2x1xi32>
    %270 = arith.select %269, %262, %260 : vector<2x1xi1>, vector<2x1xi32>
    %c16_i32 = arith.constant 16 : i32
    %271 = vector.broadcast %c16_i32 : i32 to vector<2x1xi32>
    %272 = arith.ori %270, %271 : vector<2x1xi32>
    %273 = vector.broadcast %272 : vector<2x1xi32> to vector<2x256xi32>
    %274 = arith.cmpi sge, %9, %273 : vector<2x256xi32>
    %275 = arith.extui %274 : vector<2x256xi1> to vector<2x256xi32>
    %cst_28 = arith.constant dense<0> : vector<2xi32>
    %276 = vector.multi_reduction <add>, %275, %cst_28 [1] : vector<2x256xi32> to vector<2xi32>
    %277 = vector.shape_cast %276 : vector<2xi32> to vector<2x1xi32>
    %278 = vector.broadcast %0 : i32 to vector<2x1xi32>
    %279 = arith.cmpi sge, %277, %278 : vector<2x1xi32>
    %280 = arith.select %279, %272, %270 : vector<2x1xi1>, vector<2x1xi32>
    %c8_i32 = arith.constant 8 : i32
    %281 = vector.broadcast %c8_i32 : i32 to vector<2x1xi32>
    %282 = arith.ori %280, %281 : vector<2x1xi32>
    %283 = vector.broadcast %282 : vector<2x1xi32> to vector<2x256xi32>
    %284 = arith.cmpi sge, %9, %283 : vector<2x256xi32>
    %285 = arith.extui %284 : vector<2x256xi1> to vector<2x256xi32>
    %cst_29 = arith.constant dense<0> : vector<2xi32>
    %286 = vector.multi_reduction <add>, %285, %cst_29 [1] : vector<2x256xi32> to vector<2xi32>
    %287 = vector.shape_cast %286 : vector<2xi32> to vector<2x1xi32>
    %288 = vector.broadcast %0 : i32 to vector<2x1xi32>
    %289 = arith.cmpi sge, %287, %288 : vector<2x1xi32>
    %290 = arith.select %289, %282, %280 : vector<2x1xi1>, vector<2x1xi32>
    %c4_i32 = arith.constant 4 : i32
    %291 = vector.broadcast %c4_i32 : i32 to vector<2x1xi32>
    %292 = arith.ori %290, %291 : vector<2x1xi32>
    %293 = vector.broadcast %292 : vector<2x1xi32> to vector<2x256xi32>
    %294 = arith.cmpi sge, %9, %293 : vector<2x256xi32>
    %295 = arith.extui %294 : vector<2x256xi1> to vector<2x256xi32>
    %cst_30 = arith.constant dense<0> : vector<2xi32>
    %296 = vector.multi_reduction <add>, %295, %cst_30 [1] : vector<2x256xi32> to vector<2xi32>
    %297 = vector.shape_cast %296 : vector<2xi32> to vector<2x1xi32>
    %298 = vector.broadcast %0 : i32 to vector<2x1xi32>
    %299 = arith.cmpi sge, %297, %298 : vector<2x1xi32>
    %300 = arith.select %299, %292, %290 : vector<2x1xi1>, vector<2x1xi32>
    %c2_i32 = arith.constant 2 : i32
    %301 = vector.broadcast %c2_i32 : i32 to vector<2x1xi32>
    %302 = arith.ori %300, %301 : vector<2x1xi32>
    %303 = vector.broadcast %302 : vector<2x1xi32> to vector<2x256xi32>
    %304 = arith.cmpi sge, %9, %303 : vector<2x256xi32>
    %305 = arith.extui %304 : vector<2x256xi1> to vector<2x256xi32>
    %cst_31 = arith.constant dense<0> : vector<2xi32>
    %306 = vector.multi_reduction <add>, %305, %cst_31 [1] : vector<2x256xi32> to vector<2xi32>
    %307 = vector.shape_cast %306 : vector<2xi32> to vector<2x1xi32>
    %308 = vector.broadcast %0 : i32 to vector<2x1xi32>
    %309 = arith.cmpi sge, %307, %308 : vector<2x1xi32>
    %310 = arith.select %309, %302, %300 : vector<2x1xi1>, vector<2x1xi32>
    %c1_i32 = arith.constant 1 : i32
    %311 = vector.broadcast %c1_i32 : i32 to vector<2x1xi32>
    %312 = arith.ori %310, %311 : vector<2x1xi32>
    %313 = vector.broadcast %312 : vector<2x1xi32> to vector<2x256xi32>
    %314 = arith.cmpi sge, %9, %313 : vector<2x256xi32>
    %315 = arith.extui %314 : vector<2x256xi1> to vector<2x256xi32>
    %cst_32 = arith.constant dense<0> : vector<2xi32>
    %316 = vector.multi_reduction <add>, %315, %cst_32 [1] : vector<2x256xi32> to vector<2xi32>
    %317 = vector.shape_cast %316 : vector<2xi32> to vector<2x1xi32>
    %318 = vector.broadcast %0 : i32 to vector<2x1xi32>
    %319 = arith.cmpi sge, %317, %318 : vector<2x1xi32>
    %320 = arith.select %319, %312, %310 : vector<2x1xi1>, vector<2x1xi32>
    %cst_33 = arith.constant 0xFF800000 : f32
    %321 = vector.broadcast %cst_33 : f32 to vector<2x256xf32>
    %322 = arith.cmpf oeq, %1, %321 : vector<2x256xf32>
    %323 = vector.broadcast %320 : vector<2x1xi32> to vector<2x256xi32>
    %324 = arith.cmpi sge, %9, %323 : vector<2x256xi32>
    %325 = arith.ori %322, %324 : vector<2x256xi1>
    %c0_34 = arith.constant 0 : index
    %c0_35 = arith.constant 0 : index
    %326 = vector.load %arg3[%c0_34, %c0_35] : memref<2x256xf32, #tpu.memory_space<vmem>>, vector<2x256xf32>
    %cst_36 = arith.constant 0.000000e+00 : f32
    %327 = vector.broadcast %cst_36 : f32 to vector<2x256xf32>
    %328 = arith.select %325, %326, %327 : vector<2x256xi1>, vector<2x256xf32>
    %329 = vector.shape_cast %328 : vector<2x256xf32> to vector<1x2x256xf32>
    %cst_37 = arith.constant dense<0.000000e+00> : vector<1xf32>
    %330 = vector.multi_reduction <add>, %329, %cst_37 [1, 2] : vector<1x2x256xf32> to vector<1xf32>
    %331 = vector.shape_cast %330 : vector<1xf32> to vector<1x1x1xf32>
    %332 = vector.extract %331[0, 0, 0] : f32 from vector<1x1x1xf32>
    %333 = tpu.iota {dimensions = array<i32: 0>} : vector<8x128xi32>
    %334 = tpu.iota {dimensions = array<i32: 1>} : vector<8x128xi32>
    %c0_i32_38 = arith.constant 0 : i32
    %335 = vector.broadcast %c0_i32_38 : i32 to vector<8x128xi32>
    %336 = arith.cmpi eq, %333, %335 : vector<8x128xi32>
    %c0_i32_39 = arith.constant 0 : i32
    %337 = vector.broadcast %c0_i32_39 : i32 to vector<8x128xi32>
    %338 = arith.cmpi eq, %334, %337 : vector<8x128xi32>
    %339 = arith.andi %336, %338 : vector<8x128xi1>
    %cst_40 = arith.constant 0.000000e+00 : f32
    %340 = vector.broadcast %332 : f32 to vector<8x128xf32>
    %341 = vector.broadcast %cst_40 : f32 to vector<8x128xf32>
    %342 = arith.select %339, %340, %341 : vector<8x128xi1>, vector<8x128xf32>
    %c0_41 = arith.constant 0 : index
    %c0_42 = arith.constant 0 : index
    %343 = vector.load %arg4[%c0_41, %c0_42] : memref<8x128xf32, #tpu.memory_space<vmem>>, vector<8x128xf32>
    tpu.vector_store %arg4[%c0_41, %c0_42], %342 {strides = array<i32>} : memref<8x128xf32, #tpu.memory_space<vmem>>, vector<8x128xf32>,
    return
  }
  func.func @transform_0(%arg0: i32, %arg1: memref<1xi32, #tpu.memory_space<smem>>) -> (i32, i32) {
    %c0_i32 = arith.constant 0 : i32
    %c0_i32_0 = arith.constant 0 : i32
    return %arg0, %c0_i32 : i32, i32
  }
  func.func @transform_1(%arg0: i32, %arg1: memref<1xi32, #tpu.memory_space<smem>>) -> (i32, i32) {
    %c0_i32 = arith.constant 0 : i32
    %c0_i32_0 = arith.constant 0 : i32
    return %arg0, %c0_i32 : i32, i32
  }
  func.func @transform_2(%arg0: i32, %arg1: memref<1xi32, #tpu.memory_space<smem>>) -> (i32, i32) {
    %c0_i32 = arith.constant 0 : i32
    %c0_i32_0 = arith.constant 0 : i32
    return %arg0, %c0_i32 : i32, i32
  }
}

</mosaic_0001>

<llo_original>
// kernel: multibox_loss_v2.2
$region0: #{multibox_loss_v2.2}
  #allocation0 [shape = 'u32[]', space=smem, size = 0x4, offset = 0x4, fixed_abs, tag = 'smem constant byte address 0x4 - core index']
  #allocation1 [shape = 'u32[144,128]{1,0:T(1,128)}', space=vmem, size = 0x12000, scoped, tag = 'internal scratch']
  %s0 = inlined_call_operand.vmem [shape: f32[2,8,256], index: 0, kind: input, shape index: {}]
  %s1 = inlined_call_operand.vmem [shape: s32[2,256], index: 1, kind: input, shape index: {}]
  %s2 = inlined_call_operand.vmem [shape: f32[2,256], index: 2, kind: output, shape index: {0}]
  %s3 = inlined_call_operand.vmem [shape: f32[2,256], index: 3, kind: output, shape index: {1}]
  %4 = xla_tuple %s2, %s3
  %s5 = sld [smem:[#allocation0]]
  $region87: #{multibox_loss_v2.2} parent=0
    _
  %s7 = ssub.s32 1, %s5
  %s8 = scalar_select 0, %s7, %s5
  $region1: #{multibox_loss_v2.2} parent=0
    #allocation2 [shape = 'u8[16384]{0}', space=vmem, size = 0x4000, scoped, tag = 'input window, operand 0']
    loop: start=0, step=1, limit=4
    $region2: #{multibox_loss_v2.2} parent=1 // loop_pre_header
      _
    $region3: #{multibox_loss_v2.2} parent=1 // loop_header
      %s10 = sphi 0, %s14
      %p11 = scmp.ge.s32.totalorder %s10, 4
      %s20 = sphi 0, %s22
      %s23 = sphi 0, %s20
      %s24 = sphi 0, %s23
      %s40 = sphi 0, %s24
      %s46 = sphi 0, %s48
      %s49 = sphi 0, %s46
      %s50 = sphi 0, %s49
      %s66 = sphi 0, %s50
      %s72 = sphi 0, %s74
      %s75 = sphi 0, %s72
      %s76 = sphi 0, %s75
      %s92 = sphi 0, %s76
      %s98 = sphi 0, %s100
      %s101 = sphi 0, %s98
      %s102 = sphi 0, %s101
      %s118 = sphi 0, %s102
    $region4: #{multibox_loss_v2.2} parent=1 // loop_header_branch
      %13 = sbr.rel (%p11) target = $region8
    $region5: #{multibox_loss_v2.2} parent=1 // loop_body
      %s15 = ssub.s32 %s10, 1
      %s16 = ssub.s32 %s10, 2
      %s17 = sadd.s32 %s10, 1
      %s18 = ssub.s32 %s10, %s17
      %p19 = scmp.eq.s32.totalorder %s18, 0
      %s21 = sadd.s32 %s20, 1
      %s22 = scalar_select %p19, %s20, %s21
      %p25 = pneg %p19
      %p26 = scmp.eq.s32.totalorder %s10, 1
      %p27 = por %p25, %p26
      %p28 = scmp.ne.s32.totalorder %s20, %s23
      %p29 = scmp.eq.s32.totalorder %s10, 0
      %p30 = por %p28, %p29
      %p31 = scmp.ne.s32.totalorder %s20, %s23
      %p32 = scmp.eq.s32.totalorder %s15, 1
      %p33 = por %p31, %p32
      %p34 = scmp.ne.s32.totalorder %s23, %s24
      %p35 = scmp.eq.s32.totalorder %s15, 0
      %p36 = por %p34, %p35
      %p37 = scmp.ne.s32.totalorder %s23, %s24
      %p38 = scmp.eq.s32.totalorder %s16, 1
      %p39 = por %p37, %p38
      %p41 = scmp.ne.s32.totalorder %s24, %s40
      %p42 = scmp.eq.s32.totalorder %s16, 0
      %p43 = por %p41, %p42
      %s44 = ssub.s32 %s10, %s17
      %p45 = scmp.eq.s32.totalorder %s44, 0
      %s47 = sadd.s32 %s46, 1
      %s48 = scalar_select %p45, %s46, %s47
      %p51 = pneg %p45
      %p52 = scmp.eq.s32.totalorder %s10, 1
      %p53 = por %p51, %p52
      %p54 = scmp.ne.s32.totalorder %s46, %s49
      %p55 = scmp.eq.s32.totalorder %s10, 0
      %p56 = por %p54, %p55
      %p57 = scmp.ne.s32.totalorder %s46, %s49
      %p58 = scmp.eq.s32.totalorder %s15, 1
      %p59 = por %p57, %p58
      %p60 = scmp.ne.s32.totalorder %s49, %s50
      %p61 = scmp.eq.s32.totalorder %s15, 0
      %p62 = por %p60, %p61
      %p63 = scmp.ne.s32.totalorder %s49, %s50
      %p64 = scmp.eq.s32.totalorder %s16, 1
      %p65 = por %p63, %p64
      %p67 = scmp.ne.s32.totalorder %s50, %s66
      %p68 = scmp.eq.s32.totalorder %s16, 0
      %p69 = por %p67, %p68
      %s70 = ssub.s32 %s10, %s17
      %p71 = scmp.eq.s32.totalorder %s70, 0
      %s73 = sadd.s32 %s72, 1
      %s74 = scalar_select %p71, %s72, %s73
      %p77 = pneg %p71
      %p78 = scmp.eq.s32.totalorder %s10, 1
      %p79 = por %p77, %p78
      %p80 = scmp.ne.s32.totalorder %s72, %s75
      %p81 = scmp.eq.s32.totalorder %s10, 0
      %p82 = por %p80, %p81
      %p83 = scmp.ne.s32.totalorder %s72, %s75
      %p84 = scmp.eq.s32.totalorder %s15, 1
      %p85 = por %p83, %p84
      %p86 = scmp.ne.s32.totalorder %s75, %s76
      %p87 = scmp.eq.s32.totalorder %s15, 0
      %p88 = por %p86, %p87
      %p89 = scmp.ne.s32.totalorder %s75, %s76
      %p90 = scmp.eq.s32.totalorder %s16, 1
      %p91 = por %p89, %p90
      %p93 = scmp.ne.s32.totalorder %s76, %s92
      %p94 = scmp.eq.s32.totalorder %s16, 0
      %p95 = por %p93, %p94
      %s96 = ssub.s32 %s10, %s17
      %p97 = scmp.eq.s32.totalorder %s96, 0
      %s99 = sadd.s32 %s98, 1
      %s100 = scalar_select %p97, %s98, %s99
      %p103 = pneg %p97
      %p104 = scmp.eq.s32.totalorder %s10, 1
      %p105 = por %p103, %p104
      %p106 = scmp.ne.s32.totalorder %s98, %s101
      %p107 = scmp.eq.s32.totalorder %s10, 0
      %p108 = por %p106, %p107
      %p109 = scmp.ne.s32.totalorder %s98, %s101
      %p110 = scmp.eq.s32.totalorder %s15, 1
      %p111 = por %p109, %p110
      %p112 = scmp.ne.s32.totalorder %s101, %s102
      %p113 = scmp.eq.s32.totalorder %s15, 0
      %p114 = por %p112, %p113
      %p115 = scmp.ne.s32.totalorder %s101, %s102
      %p116 = scmp.eq.s32.totalorder %s16, 1
      %p117 = por %p115, %p116
      %p119 = scmp.ne.s32.totalorder %s102, %s118
      %p120 = scmp.eq.s32.totalorder %s16, 0
      %p121 = por %p119, %p120
      %p122 = scmp.le.s32.totalorder 1, %s10
      %p123 = scmp.lt.s32.totalorder %s10, 3
      %p124 = pnand %p122, %p123
      %p125 = pneg %p124
      // Predicated region
      $region9: #{multibox_loss_v2.2} parent=5 // pred_check
        _
      $region10: #{multibox_loss_v2.2} parent=5 // pred_check_branch
        %127 = sbr.rel (%p124) target = $region12
      $region11: #{multibox_loss_v2.2} parent=5 // pred_region
        %s128 = ssub.s32 %s10, 1
      $region12: #{multibox_loss_v2.2} parent=5 // pred_fallthru
        _
      %p129 = scmp.lt.s32.totalorder %s10, 2
      // Predicated region
      $region13: #{multibox_loss_v2.2} parent=5 // pred_check
        %p130 = pneg %p129
      $region14: #{multibox_loss_v2.2} parent=5 // pred_check_branch
        %132 = sbr.rel (%p130) target = $region16
      $region15: #{multibox_loss_v2.2} parent=5 // pred_region
        // Predicated region
        $region17: #{multibox_loss_v2.2} parent=15 // pred_check
          %p133 = pneg %p30
        $region18: #{multibox_loss_v2.2} parent=15 // pred_check_branch
          %135 = sbr.rel (%p133) target = $region20
        $region19: #{multibox_loss_v2.2} parent=15 // pred_region
          %s136 = sand.u32 %s20, 1
          %s137 = sand.u32 %s20, 1
          %s138 = smul.addr %s137, 16
          %s139 = scalar_lea.vmem [#allocation2], %s138
          %s140 = smul.addr %s10, 8
          %s141 = scalar_lea.vmem %s0, %s140
          // Predicated region
          $region21: #{multibox_loss_v2.2} parent=19 // pred_check
            _
          $region22: #{multibox_loss_v2.2} parent=19 // pred_check_branch
            %143 = sbr.rel (0) target = $region24
          $region23: #{multibox_loss_v2.2} parent=19 // pred_region
            // Predicated region
            $region25: #{multibox_loss_v2.2} parent=23 // pred_check
              _
            $region26: #{multibox_loss_v2.2} parent=23 // pred_check_branch
              %145 = sbr.rel (0) target = $region28
            $region27: #{multibox_loss_v2.2} parent=23 // pred_region
              // Predicated region
              $region40: #{multibox_loss_v2.2} parent=27 // pred_check
                _
              $region41: #{multibox_loss_v2.2} parent=27 // pred_check_branch
                %162 = sbr.rel (0) target = $region43
              $region42: #{multibox_loss_v2.2} parent=27 // pred_region
                loop: start=0, step=1, limit=1
                $region44: #{multibox_loss_v2.2} parent=42 // loop_pre_header
                  _
                $region45: #{multibox_loss_v2.2} parent=42 // loop_header
                  %s164 = sphi 0, %s168
                  %p165 = scmp.ge.s32.totalorder %s164, 1
                  %s169 = sphi %s141, %s141
                  %s170 = sphi %s139, %s139
                $region46: #{multibox_loss_v2.2} parent=42 // loop_header_branch
                  %167 = sbr.rel (%p165) target = $region50
                $region47: #{multibox_loss_v2.2} parent=42 // loop_body
                  %v171 = vld [vmem:[%s169] sm:$0xff]
                  %172 = vst [vmem:[%s170] sm:$0xff] %v171
                  %v173 = vld [vmem:[%s169 + $0x10] sm:$0xff]
                  %174 = vst [vmem:[%s170 + $0x8] sm:$0xff] %v173
                $region48: #{multibox_loss_v2.2} parent=42 // loop_footer
                  %s168 = sadd.s32 1, %s164
                $region49: #{multibox_loss_v2.2} parent=42 // loop_footer_branch
                  %163 = sbr.rel target = $region45
                $region50: #{multibox_loss_v2.2} parent=42 // loop_exit
                  _
              $region43: #{multibox_loss_v2.2} parent=27 // pred_fallthru
                _
              // Predicated region
              $region51: #{multibox_loss_v2.2} parent=27 // pred_check
                _
              $region52: #{multibox_loss_v2.2} parent=27 // pred_check_branch
                %176 = sbr.rel target = $region54
              $region53: #{multibox_loss_v2.2} parent=27 // pred_region
                _
              $region54: #{multibox_loss_v2.2} parent=27 // pred_fallthru
                _
            $region28: #{multibox_loss_v2.2} parent=23 // pred_fallthru
              _
            // Predicated region
            $region29: #{multibox_loss_v2.2} parent=23 // pred_check
              _
            $region30: #{multibox_loss_v2.2} parent=23 // pred_check_branch
              %147 = sbr.rel target = $region32
            $region31: #{multibox_loss_v2.2} parent=23 // pred_region
              loop: start=0, step=1, limit=1
              $region33: #{multibox_loss_v2.2} parent=31 // loop_pre_header
                _
              $region34: #{multibox_loss_v2.2} parent=31 // loop_header
                %s150 = sphi 0, %s154
                %p151 = scmp.ge.s32.totalorder %s150, 1
                %s155 = sphi %s141, %s141
                %s156 = sphi %s139, %s139
              $region35: #{multibox_loss_v2.2} parent=31 // loop_header_branch
                %153 = sbr.rel (%p151) target = $region39
              $region36: #{multibox_loss_v2.2} parent=31 // loop_body
                %v157 = vld [vmem:[%s155] sm:$0xff]
                %158 = vst [vmem:[%s156] sm:$0xff] %v157
                %v159 = vld [vmem:[%s155 + $0x10] sm:$0xff]
                %160 = vst [vmem:[%s156 + $0x8] sm:$0xff] %v159
              $region37: #{multibox_loss_v2.2} parent=31 // loop_footer
                %s154 = sadd.s32 1, %s150
              $region38: #{multibox_loss_v2.2} parent=31 // loop_footer_branch
                %149 = sbr.rel target = $region34
              $region39: #{multibox_loss_v2.2} parent=31 // loop_exit
                _
            $region32: #{multibox_loss_v2.2} parent=23 // pred_fallthru
              _
          $region24: #{multibox_loss_v2.2} parent=19 // pred_fallthru
            _
          %177 = vnop
        $region20: #{multibox_loss_v2.2} parent=15 // pred_fallthru
          _
        // Predicated region
        $region55: #{multibox_loss_v2.2} parent=15 // pred_check
          %p178 = pneg %p56
        $region56: #{multibox_loss_v2.2} parent=15 // pred_check_branch
          %180 = sbr.rel (%p178) target = $region58
        $region57: #{multibox_loss_v2.2} parent=15 // pred_region
          %p181 = scmp.lt.s32.totalorder %s10, 1
          %s182 = scalar_select %p181, %s10, 1
          %s183 = smul.addr %s182, 2
          %s184 = scalar_lea.vmem %s1, %s183
        $region58: #{multibox_loss_v2.2} parent=15 // pred_fallthru
          _
      $region16: #{multibox_loss_v2.2} parent=5 // pred_fallthru
        _
      %p185 = scmp.le.s32.totalorder 1, %s10
      %p186 = scmp.lt.s32.totalorder %s10, 3
      %p187 = pnand %p185, %p186
      %p188 = pneg %p187
      // Predicated region
      $region59: #{multibox_loss_v2.2} parent=5 // pred_check
        _
      $region60: #{multibox_loss_v2.2} parent=5 // pred_check_branch
        %190 = sbr.rel (%p187) target = $region62
      $region61: #{multibox_loss_v2.2} parent=5 // pred_region
        %s191 = ssub.s32 %s10, 1
        %s192 = sand.u32 %s23, 1
        %s193 = sand.u32 %s23, 1
        %s194 = smul.addr %s193, 16
        %s195 = scalar_lea.vmem [#allocation2], %s194
        // Predicated region
        $region63: #{multibox_loss_v2.2} parent=61 // pred_check
          %p196 = pneg %p36
        $region64: #{multibox_loss_v2.2} parent=61 // pred_check_branch
          %198 = sbr.rel (%p196) target = $region66
        $region65: #{multibox_loss_v2.2} parent=61 // pred_region
          _
        $region66: #{multibox_loss_v2.2} parent=61 // pred_fallthru
          _
        %s199 = sand.u32 %s23, 1
        %s200 = sand.u32 %s23, 1
        %s201 = smul.addr %s200, 16
        %s202 = scalar_lea.vmem [#allocation2], %s201
        %p203 = pneg %p36
        %p204 = pneg %p33
        %p205 = scmp.lt.s32.totalorder %s15, 1
        %s206 = scalar_select %p205, %s15, 1
        %s207 = smul.addr %s206, 2
        %s208 = scalar_lea.vmem %s1, %s207
        %p209 = pneg %p62
        %p210 = pneg %p59
        %p211 = pneg %p88
        %p212 = pneg %p85
        %p213 = scmp.lt.s32.totalorder %s15, 1
        %s214 = scalar_select %p213, %s15, 1
        %s215 = smul.addr %s214, 2
        %s216 = scalar_lea.vmem %s2, %s215
        %p217 = pneg %p114
        %p218 = pneg %p111
        %p219 = scmp.lt.s32.totalorder %s15, 1
        %s220 = scalar_select %p219, %s15, 1
        %s221 = smul.addr %s220, 2
        %s222 = scalar_lea.vmem %s3, %s221
        %p223 = scmp.lt.s32.totalorder %s15, 1
        %s224 = scalar_select %p223, %s15, 1
        %s225 = smul.addr %s224, 2
        %s226 = scalar_lea.vmem %s1, %s225
        %p227 = scmp.lt.s32.totalorder %s15, 1
        %s228 = scalar_select %p227, %s15, 1
        %s229 = smul.addr %s228, 2
        %s230 = scalar_lea.vmem %s2, %s229
        %p231 = scmp.lt.s32.totalorder %s15, 1
        %s232 = scalar_select %p231, %s15, 1
        %s233 = smul.addr %s232, 2
        %s234 = scalar_lea.vmem %s3, %s233
        %v235 = vld [vmem:[%s195] sm:$0xff]
        %v236 = vld [vmem:[%s195 + $0x8] sm:$0xff]
        %v237 = vld [vmem:[%s226] sm:$0x3]
        %v238 = vrot.slane %v235, 4
        %v239 = vmax.f32 %v235, %v238
        %v240 = vrot.slane %v239, 2
        %v241 = vmax.f32 %v239, %v240
        %v242 = vrot.slane %v241, 1
        %v243 = vmax.f32 %v241, %v242
        %v244 = vrot.slane %v236, 4
        %v245 = vmax.f32 %v236, %v244
        %v246 = vrot.slane %v245, 2
        %v247 = vmax.f32 %v245, %v246
        %v248 = vrot.slane %v247, 1
        %v249 = vmax.f32 %v247, %v248
        %v250 = vsub.f32 %v235, %v243
        %v251 = vsub.f32 %v236, %v249
        %v252 = vmul.f32 %v250, 1.442695
        %v253 = vpow.pop %v252
        %v254 = vmul.f32 %v251, 1.442695
        %v255 = vpow.pop %v254
        %v256 = vrot.slane %v253, 4
        %v257 = vadd.f32 %v253, %v256
        %v258 = vrot.slane %v257, 2
        %v259 = vadd.f32 %v257, %v258
        %v260 = vrot.slane %v259, 1
        %v261 = vadd.f32 %v259, %v260
        %v262 = vrot.slane %v255, 4
        %v263 = vadd.f32 %v255, %v262
        %v264 = vrot.slane %v263, 2
        %v265 = vadd.f32 %v263, %v264
        %v266 = vrot.slane %v265, 1
        %v267 = vadd.f32 %v265, %v266
        %v268 = vlog2.pop %v261
        %v269 = vmul.f32 %v268, 0.6931472
        %v270 = vlog2.pop %v267
        %v271 = vmul.f32 %v270, 0.6931472
        %v272 = vsub.f32 %v250, %v269
        %v273 = vsub.f32 %v251, %v271
        %v274 = vsub.f32 0.0, %v272
        %v275 = vsub.f32 0.0, %v273
        %v276 = vlaneseq
        %v277 = vshrl.u32 %v276, 7
        %v279 = vunpack.c.l.s4 1966171168
        %v280 = vunpack.c.0.s8 %v279
        %v281 = vlaneseq
        %v282 = vshrl.u32 %v281, 7
        %v283 = vsub.s32 %v280, %v282
        %v284 = vrot.slane %v237, %v283
        %v285 = vcombine.high %v284, %v284
        %v287 = vunpack.c.l.s4 1966171168
        %v288 = vunpack.c.0.s8 %v287
        %v289 = vlaneseq
        %v290 = vshrl.u32 %v289, 7
        %v291 = vsub.s32 %v288, %v290
        %v292 = vrot.slane %v284, %v291
        %v294 = vunpack.c.l.s4 1966171168
        %v295 = vunpack.c.0.s8 %v294
        %v296 = vlaneseq
        %v297 = vshrl.u32 %v296, 7
        %v298 = vsub.s32 %v295, %v297
        %v299 = vrot.slane %v285, %v298
        %v300 = vlaneseq
        %v301 = vshrl.u32 %v300, 7
        %v302 = vsub.s32 0, %v301
        %v303 = vrot.slane %v292, %v302
        %v304 = vlaneseq
        %v305 = vshrl.u32 %v304, 7
        %v306 = vsub.s32 0, %v305
        %v307 = vrot.slane %v299, %v306
        %vm308 = vcmp.eq.s32.totalorder %v277, %v303
        %vm309 = vcmp.eq.s32.totalorder %v277, %v307
        %v310 = vsel %vm308, %v272, 0.0
        %v311 = vsel %vm309, %v273, 0.0
        %v312 = vrot.slane %v310, 4
        %v313 = vadd.f32 %v310, %v312
        %v314 = vrot.slane %v313, 2
        %v315 = vadd.f32 %v313, %v314
        %v316 = vrot.slane %v315, 1
        %v317 = vadd.f32 %v315, %v316
        %v318 = vrot.slane %v311, 4
        %v319 = vadd.f32 %v311, %v318
        %v320 = vrot.slane %v319, 2
        %v321 = vadd.f32 %v319, %v320
        %v322 = vrot.slane %v321, 1
        %v323 = vadd.f32 %v321, %v322
        %v324 = vrot.slane %v250, 4
        %v325 = vadd.f32 %v250, %v324
        %v326 = vrot.slane %v325, 2
        %v327 = vadd.f32 %v325, %v326
        %v328 = vrot.slane %v327, 1
        %v329 = vadd.f32 %v327, %v328
        %v330 = vrot.slane %v251, 4
        %v331 = vadd.f32 %v251, %v330
        %v332 = vrot.slane %v331, 2
        %v333 = vadd.f32 %v331, %v332
        %v334 = vrot.slane %v333, 1
        %v335 = vadd.f32 %v333, %v334
        %v336 = vmul.f32 %v269, 8.0
        %v337 = vmul.f32 %v271, 8.0
        %v338 = vsub.f32 %v329, %v336
        %v339 = vsub.f32 %v335, %v337
        %v340 = vmul.f32 %v317, 0.9
        %v341 = vmul.f32 %v323, 0.9
        %v342 = vmul.f32 %v338, 0.0125
        %v343 = vmul.f32 %v339, 0.0125
        %v344 = vadd.f32 %v340, %v342
        %v345 = vadd.f32 %v341, %v343
        %v346 = vsub.f32 0.0, %v344
        %v347 = vsub.f32 0.0, %v345
        %v348 = vlaneseq
        %v349 = vand.u32 %v348, 127
        %s350 = smul.u32 %s15, 128
        %v351 = vstv %s350
        %v352 = vadd.s32 %v349, %v351
        %vm353 = vcmp.lt.s32.totalorder %v352, 200
        %vm354 = vcmp.gt.s32.totalorder %v237, 0
        %vm355 = vmxor %vm353, 1
        %vm356 = vmor %vm354, %vm355
        %v359 = vrot.slane %v275, 7
        %vm360 = vcmask 1041409
        %v361 = vsel %vm360, %v359, %v274
        %v363 = vsel %vm356, -inf, %v361
        %364 = vst [vmem:[%s230] sm:$0x3] %v363
        %v367 = vsel %vm360, %v347, %v346
        %v369 = vsel %vm353, %v367, 0.0
        %370 = vst [vmem:[%s234] sm:$0x3] %v369
        %p371 = scmp.lt.s32.totalorder %s15, 1
        %s372 = scalar_select %p371, %s15, 1
        %s373 = smul.addr %s372, 2
        %s374 = scalar_lea.vmem %s2, %s373
        %p375 = scmp.lt.s32.totalorder %s15, 1
        %s376 = scalar_select %p375, %s15, 1
        %s377 = smul.addr %s376, 2
        %s378 = scalar_lea.vmem %s3, %s377
        // Predicated region
        $region67: #{multibox_loss_v2.2} parent=61 // pred_check
          %p379 = pneg %p85
        $region68: #{multibox_loss_v2.2} parent=61 // pred_check_branch
          %381 = sbr.rel (%p379) target = $region70
        $region69: #{multibox_loss_v2.2} parent=61 // pred_region
          _
        $region70: #{multibox_loss_v2.2} parent=61 // pred_fallthru
          _
        // Predicated region
        $region71: #{multibox_loss_v2.2} parent=61 // pred_check
          %p382 = pneg %p111
        $region72: #{multibox_loss_v2.2} parent=61 // pred_check_branch
          %384 = sbr.rel (%p382) target = $region74
        $region73: #{multibox_loss_v2.2} parent=61 // pred_region
          _
        $region74: #{multibox_loss_v2.2} parent=61 // pred_fallthru
          _
      $region62: #{multibox_loss_v2.2} parent=5 // pred_fallthru
        _
      %p385 = scmp.le.s32.totalorder 2, %s10
      // Predicated region
      $region75: #{multibox_loss_v2.2} parent=5 // pred_check
        %p386 = pneg %p385
      $region76: #{multibox_loss_v2.2} parent=5 // pred_check_branch
        %388 = sbr.rel (%p386) target = $region78
      $region77: #{multibox_loss_v2.2} parent=5 // pred_region
        %s389 = ssub.s32 %s10, 2
        // Predicated region
        $region79: #{multibox_loss_v2.2} parent=77 // pred_check
          %p390 = pneg %p91
        $region80: #{multibox_loss_v2.2} parent=77 // pred_check_branch
          %392 = sbr.rel (%p390) target = $region82
        $region81: #{multibox_loss_v2.2} parent=77 // pred_region
          %p393 = scmp.lt.s32.totalorder %s16, 1
          %s394 = scalar_select %p393, %s16, 1
          %s395 = smul.addr %s394, 2
          %s396 = scalar_lea.vmem %s2, %s395
        $region82: #{multibox_loss_v2.2} parent=77 // pred_fallthru
          _
        // Predicated region
        $region83: #{multibox_loss_v2.2} parent=77 // pred_check
          %p397 = pneg %p117
        $region84: #{multibox_loss_v2.2} parent=77 // pred_check_branch
          %399 = sbr.rel (%p397) target = $region86
        $region85: #{multibox_loss_v2.2} parent=77 // pred_region
          %p400 = scmp.lt.s32.totalorder %s16, 1
          %s401 = scalar_select %p400, %s16, 1
          %s402 = smul.addr %s401, 2
          %s403 = scalar_lea.vmem %s3, %s402
        $region86: #{multibox_loss_v2.2} parent=77 // pred_fallthru
          _
      $region78: #{multibox_loss_v2.2} parent=5 // pred_fallthru
        _
    $region6: #{multibox_loss_v2.2} parent=1 // loop_footer
      %s14 = sadd.s32 1, %s10
    $region7: #{multibox_loss_v2.2} parent=1 // loop_footer_branch
      %9 = sbr.rel target = $region3
    $region8: #{multibox_loss_v2.2} parent=1 // loop_exit
      _

// kernel: multibox_loss_v2.3
$region0: #{multibox_loss_v2.3}
  #allocation0 [shape = 'u32[]', space=smem, size = 0x4, offset = 0x4, fixed_abs, tag = 'smem constant byte address 0x4 - core index']
  #allocation1 [shape = 'u32[144,128]{1,0:T(1,128)}', space=vmem, size = 0x12000, scoped, tag = 'internal scratch']
  #allocation2 [shape = 's32[1]{0}', space=sflag, size = 0x4, scoped, tag = 'scoped memory for multibox_loss_v2.3']
  #allocation3 [shape = 's32[1]{0:T(128)S(6)}', space=smem, size = 0x200, scoped, tag = 'prefetched SMEM operand 0']
  %s0 = inlined_call_operand.<no memory space> [shape: s32[1], index: 0, kind: input, shape index: {}]
  %s1 = inlined_call_operand.vmem [shape: f32[2,256], index: 1, kind: input, shape index: {}]
  %s2 = inlined_call_operand.vmem [shape: f32[2,256], index: 2, kind: input, shape index: {}]
  %s3 = inlined_call_operand.vmem [shape: f32[8,128], index: 3, kind: output, shape index: {}]
  %s4 = sld [smem:[#allocation0]]
  $region18: #{multibox_loss_v2.3} parent=0
    _
  %s6 = ssub.s32 1, %s4
  %s7 = scalar_select 0, %s6, %s4
  %8 = sst [smem:[#allocation3]] %s0
  // Predicated region
  $region2: #{multibox_loss_v2.3} parent=0 // pred_check
    _
  $region3: #{multibox_loss_v2.3} parent=0 // pred_check_branch
    %10 = sbr.rel (0) target = $region5
  $region4: #{multibox_loss_v2.3} parent=0 // pred_region
    _
  $region5: #{multibox_loss_v2.3} parent=0 // pred_fallthru
    _
  // Predicated region
  $region6: #{multibox_loss_v2.3} parent=0 // pred_check
    _
  $region7: #{multibox_loss_v2.3} parent=0 // pred_check_branch
    %12 = sbr.rel (0) target = $region9
  $region8: #{multibox_loss_v2.3} parent=0 // pred_region
    _
  $region9: #{multibox_loss_v2.3} parent=0 // pred_fallthru
    _
  %s13 = sld [smem:[#allocation3]]
  %v14 = vld [vmem:[%s1] sm:$0xf]
  %v17 = vunpack.c.l.s4 1983009808
  %v18 = vunpack.c.0.s8 %v17
  %v19 = vlaneseq
  %v20 = vshrl.u32 %v19, 7
  %v21 = vsub.s32 %v18, %v20
  %v22 = vrot.slane %v14, %v21
  %v23 = vcombine.high %v22, %v22
  %vm24 = vcmp.lt.s32.totalorder %v22, 0
  %vm25 = vcmp.lt.s32.totalorder %v23, 0
  %v26 = vxor.u32 %v22, 2147483647
  %v27 = vxor.u32 %v23, 2147483647
  %v28 = vsel %vm24, %v26, %v22
  %v29 = vsel %vm25, %v27, %v23
  %vm30 = vcmp.gt.s32.totalorder %v28, 4294967295
  %v31 = vsel %vm30, %v28, 4294967295
  %vm32 = vcmp.gt.s32.totalorder %v29, 4294967295
  %v33 = vsel %vm32, %v29, 4294967295
  %vm34 = vcmp.ge.s32.totalorder %v31, 1073741824
  %vm35 = vcmp.ge.s32.totalorder %v33, 1073741824
  %v36 = vsel %vm34, 1, 0
  %v37 = vsel %vm35, 1, 0
  %vm38 = vcmask 1041408
  %v39 = vsel %vm38, %v36, 0
  %v40 = vsel %vm38, %v37, 0
  %v41 = vadd.s32 %v39, %v40
  %v42 = vand.u32 %v41, 65535
  %v43 = vshrl.u32 %v41, 16
  %v44 = vcvt.s32.f32 %v42
  %v45 = vcvt.s32.f32 %v43
  %46 = vadd.xlane.f32.xlu0 %v44
  %v47 = vpop.xlane.xlu0 %46
  %48 = vadd.xlane.f32.xlu0 %v45
  %v49 = vpop.xlane.xlu0 %48
  %v50 = vcvt.f32.s32 %v47
  %v51 = vcvt.f32.s32 %v49
  %v52 = vshll.u32 %v51, 16
  %v53 = vadd.s32 %v52, %v50
  %v54 = vstv %s13
  %vm55 = vcmp.ge.s32.totalorder %v53, %v54
  %v56 = vsel %vm55, 1073741824, 0
  %v57 = vor.u32 %v56, 536870912
  %vm58 = vcmp.ge.s32.totalorder %v31, %v57
  %vm59 = vcmp.ge.s32.totalorder %v33, %v57
  %v60 = vsel %vm58, 1, 0
  %v61 = vsel %vm59, 1, 0
  %v62 = vsel %vm38, %v60, 0
  %v63 = vsel %vm38, %v61, 0
  %v64 = vadd.s32 %v62, %v63
  %v65 = vand.u32 %v64, 65535
  %v66 = vshrl.u32 %v64, 16
  %v67 = vcvt.s32.f32 %v65
  %v68 = vcvt.s32.f32 %v66
  %69 = vadd.xlane.f32.xlu0 %v67
  %v70 = vpop.xlane.xlu0 %69
  %71 = vadd.xlane.f32.xlu0 %v68
  %v72 = vpop.xlane.xlu0 %71
  %v73 = vcvt.f32.s32 %v70
  %v74 = vcvt.f32.s32 %v72
  %v75 = vshll.u32 %v74, 16
  %v76 = vadd.s32 %v75, %v73
  %vm77 = vcmp.ge.s32.totalorder %v76, %v54
  %v78 = vsel %vm77, %v57, %v56
  %v79 = vor.u32 %v78, 268435456
  %vm80 = vcmp.ge.s32.totalorder %v31, %v79
  %vm81 = vcmp.ge.s32.totalorder %v33, %v79
  %v82 = vsel %vm80, 1, 0
  %v83 = vsel %vm81, 1, 0
  %v84 = vsel %vm38, %v82, 0
  %v85 = vsel %vm38, %v83, 0
  %v86 = vadd.s32 %v84, %v85
  %v87 = vand.u32 %v86, 65535
  %v88 = vshrl.u32 %v86, 16
  %v89 = vcvt.s32.f32 %v87
  %v90 = vcvt.s32.f32 %v88
  %91 = vadd.xlane.f32.xlu0 %v89
  %v92 = vpop.xlane.xlu0 %91
  %93 = vadd.xlane.f32.xlu0 %v90
  %v94 = vpop.xlane.xlu0 %93
  %v95 = vcvt.f32.s32 %v92
  %v96 = vcvt.f32.s32 %v94
  %v97 = vshll.u32 %v96, 16
  %v98 = vadd.s32 %v97, %v95
  %vm99 = vcmp.ge.s32.totalorder %v98, %v54
  %v100 = vsel %vm99, %v79, %v78
  %v101 = vor.u32 %v100, 134217728
  %vm102 = vcmp.ge.s32.totalorder %v31, %v101
  %vm103 = vcmp.ge.s32.totalorder %v33, %v101
  %v104 = vsel %vm102, 1, 0
  %v105 = vsel %vm103, 1, 0
  %v106 = vsel %vm38, %v104, 0
  %v107 = vsel %vm38, %v105, 0
  %v108 = vadd.s32 %v106, %v107
  %v109 = vand.u32 %v108, 65535
  %v110 = vshrl.u32 %v108, 16
  %v111 = vcvt.s32.f32 %v109
  %v112 = vcvt.s32.f32 %v110
  %113 = vadd.xlane.f32.xlu0 %v111
  %v114 = vpop.xlane.xlu0 %113
  %115 = vadd.xlane.f32.xlu0 %v112
  %v116 = vpop.xlane.xlu0 %115
  %v117 = vcvt.f32.s32 %v114
  %v118 = vcvt.f32.s32 %v116
  %v119 = vshll.u32 %v118, 16
  %v120 = vadd.s32 %v119, %v117
  %vm121 = vcmp.ge.s32.totalorder %v120, %v54
  %v122 = vsel %vm121, %v101, %v100
  %v123 = vor.u32 %v122, 67108864
  %vm124 = vcmp.ge.s32.totalorder %v31, %v123
  %vm125 = vcmp.ge.s32.totalorder %v33, %v123
  %v126 = vsel %vm124, 1, 0
  %v127 = vsel %vm125, 1, 0
  %v128 = vsel %vm38, %v126, 0
  %v129 = vsel %vm38, %v127, 0
  %v130 = vadd.s32 %v128, %v129
  %v131 = vand.u32 %v130, 65535
  %v132 = vshrl.u32 %v130, 16
  %v133 = vcvt.s32.f32 %v131
  %v134 = vcvt.s32.f32 %v132
  %135 = vadd.xlane.f32.xlu0 %v133
  %v136 = vpop.xlane.xlu0 %135
  %137 = vadd.xlane.f32.xlu0 %v134
  %v138 = vpop.xlane.xlu0 %137
  %v139 = vcvt.f32.s32 %v136
  %v140 = vcvt.f32.s32 %v138
  %v141 = vshll.u32 %v140, 16
  %v142 = vadd.s32 %v141, %v139
  %vm143 = vcmp.ge.s32.totalorder %v142, %v54
  %v144 = vsel %vm143, %v123, %v122
  %v145 = vor.u32 %v144, 33554432
  %vm146 = vcmp.ge.s32.totalorder %v31, %v145
  %vm147 = vcmp.ge.s32.totalorder %v33, %v145
  %v148 = vsel %vm146, 1, 0
  %v149 = vsel %vm147, 1, 0
  %v150 = vsel %vm38, %v148, 0
  %v151 = vsel %vm38, %v149, 0
  %v152 = vadd.s32 %v150, %v151
  %v153 = vand.u32 %v152, 65535
  %v154 = vshrl.u32 %v152, 16
  %v155 = vcvt.s32.f32 %v153
  %v156 = vcvt.s32.f32 %v154
  %157 = vadd.xlane.f32.xlu0 %v155
  %v158 = vpop.xlane.xlu0 %157
  %159 = vadd.xlane.f32.xlu0 %v156
  %v160 = vpop.xlane.xlu0 %159
  %v161 = vcvt.f32.s32 %v158
  %v162 = vcvt.f32.s32 %v160
  %v163 = vshll.u32 %v162, 16
  %v164 = vadd.s32 %v163, %v161
  %vm165 = vcmp.ge.s32.totalorder %v164, %v54
  %v166 = vsel %vm165, %v145, %v144
  %v167 = vor.u32 %v166, 16777216
  %vm168 = vcmp.ge.s32.totalorder %v31, %v167
  %vm169 = vcmp.ge.s32.totalorder %v33, %v167
  %v170 = vsel %vm168, 1, 0
  %v171 = vsel %vm169, 1, 0
  %v172 = vsel %vm38, %v170, 0
  %v173 = vsel %vm38, %v171, 0
  %v174 = vadd.s32 %v172, %v173
  %v175 = vand.u32 %v174, 65535
  %v176 = vshrl.u32 %v174, 16
  %v177 = vcvt.s32.f32 %v175
  %v178 = vcvt.s32.f32 %v176
  %179 = vadd.xlane.f32.xlu0 %v177
  %v180 = vpop.xlane.xlu0 %179
  %181 = vadd.xlane.f32.xlu0 %v178
  %v182 = vpop.xlane.xlu0 %181
  %v183 = vcvt.f32.s32 %v180
  %v184 = vcvt.f32.s32 %v182
  %v185 = vshll.u32 %v184, 16
  %v186 = vadd.s32 %v185, %v183
  %vm187 = vcmp.ge.s32.totalorder %v186, %v54
  %v188 = vsel %vm187, %v167, %v166
  %v189 = vor.u32 %v188, 8388608
  %vm190 = vcmp.ge.s32.totalorder %v31, %v189
  %vm191 = vcmp.ge.s32.totalorder %v33, %v189
  %v192 = vsel %vm190, 1, 0
  %v193 = vsel %vm191, 1, 0
  %v194 = vsel %vm38, %v192, 0
  %v195 = vsel %vm38, %v193, 0
  %v196 = vadd.s32 %v194, %v195
  %v197 = vand.u32 %v196, 65535
  %v198 = vshrl.u32 %v196, 16
  %v199 = vcvt.s32.f32 %v197
  %v200 = vcvt.s32.f32 %v198
  %201 = vadd.xlane.f32.xlu0 %v199
  %v202 = vpop.xlane.xlu0 %201
  %203 = vadd.xlane.f32.xlu0 %v200
  %v204 = vpop.xlane.xlu0 %203
  %v205 = vcvt.f32.s32 %v202
  %v206 = vcvt.f32.s32 %v204
  %v207 = vshll.u32 %v206, 16
  %v208 = vadd.s32 %v207, %v205
  %vm209 = vcmp.ge.s32.totalorder %v208, %v54
  %v210 = vsel %vm209, %v189, %v188
  %v211 = vor.u32 %v210, 4194304
  %vm212 = vcmp.ge.s32.totalorder %v31, %v211
  %vm213 = vcmp.ge.s32.totalorder %v33, %v211
  %v214 = vsel %vm212, 1, 0
  %v215 = vsel %vm213, 1, 0
  %v216 = vsel %vm38, %v214, 0
  %v217 = vsel %vm38, %v215, 0
  %v218 = vadd.s32 %v216, %v217
  %v219 = vand.u32 %v218, 65535
  %v220 = vshrl.u32 %v218, 16
  %v221 = vcvt.s32.f32 %v219
  %v222 = vcvt.s32.f32 %v220
  %223 = vadd.xlane.f32.xlu0 %v221
  %v224 = vpop.xlane.xlu0 %223
  %225 = vadd.xlane.f32.xlu0 %v222
  %v226 = vpop.xlane.xlu0 %225
  %v227 = vcvt.f32.s32 %v224
  %v228 = vcvt.f32.s32 %v226
  %v229 = vshll.u32 %v228, 16
  %v230 = vadd.s32 %v229, %v227
  %vm231 = vcmp.ge.s32.totalorder %v230, %v54
  %v232 = vsel %vm231, %v211, %v210
  %v233 = vor.u32 %v232, 2097152
  %vm234 = vcmp.ge.s32.totalorder %v31, %v233
  %vm235 = vcmp.ge.s32.totalorder %v33, %v233
  %v236 = vsel %vm234, 1, 0
  %v237 = vsel %vm235, 1, 0
  %v238 = vsel %vm38, %v236, 0
  %v239 = vsel %vm38, %v237, 0
  %v240 = vadd.s32 %v238, %v239
  %v241 = vand.u32 %v240, 65535
  %v242 = vshrl.u32 %v240, 16
  %v243 = vcvt.s32.f32 %v241
  %v244 = vcvt.s32.f32 %v242
  %245 = vadd.xlane.f32.xlu0 %v243
  %v246 = vpop.xlane.xlu0 %245
  %247 = vadd.xlane.f32.xlu0 %v244
  %v248 = vpop.xlane.xlu0 %247
  %v249 = vcvt.f32.s32 %v246
  %v250 = vcvt.f32.s32 %v248
  %v251 = vshll.u32 %v250, 16
  %v252 = vadd.s32 %v251, %v249
  %vm253 = vcmp.ge.s32.totalorder %v252, %v54
  %v254 = vsel %vm253, %v233, %v232
  %v255 = vor.u32 %v254, 1048576
  %vm256 = vcmp.ge.s32.totalorder %v31, %v255
  %vm257 = vcmp.ge.s32.totalorder %v33, %v255
  %v258 = vsel %vm256, 1, 0
  %v259 = vsel %vm257, 1, 0
  %v260 = vsel %vm38, %v258, 0
  %v261 = vsel %vm38, %v259, 0
  %v262 = vadd.s32 %v260, %v261
  %v263 = vand.u32 %v262, 65535
  %v264 = vshrl.u32 %v262, 16
  %v265 = vcvt.s32.f32 %v263
  %v266 = vcvt.s32.f32 %v264
  %267 = vadd.xlane.f32.xlu0 %v265
  %v268 = vpop.xlane.xlu0 %267
  %269 = vadd.xlane.f32.xlu0 %v266
  %v270 = vpop.xlane.xlu0 %269
  %v271 = vcvt.f32.s32 %v268
  %v272 = vcvt.f32.s32 %v270
  %v273 = vshll.u32 %v272, 16
  %v274 = vadd.s32 %v273, %v271
  %vm275 = vcmp.ge.s32.totalorder %v274, %v54
  %v276 = vsel %vm275, %v255, %v254
  %v277 = vor.u32 %v276, 524288
  %vm278 = vcmp.ge.s32.totalorder %v31, %v277
  %vm279 = vcmp.ge.s32.totalorder %v33, %v277
  %v280 = vsel %vm278, 1, 0
  %v281 = vsel %vm279, 1, 0
  %v282 = vsel %vm38, %v280, 0
  %v283 = vsel %vm38, %v281, 0
  %v284 = vadd.s32 %v282, %v283
  %v285 = vand.u32 %v284, 65535
  %v286 = vshrl.u32 %v284, 16
  %v287 = vcvt.s32.f32 %v285
  %v288 = vcvt.s32.f32 %v286
  %289 = vadd.xlane.f32.xlu0 %v287
  %v290 = vpop.xlane.xlu0 %289
  %291 = vadd.xlane.f32.xlu0 %v288
  %v292 = vpop.xlane.xlu0 %291
  %v293 = vcvt.f32.s32 %v290
  %v294 = vcvt.f32.s32 %v292
  %v295 = vshll.u32 %v294, 16
  %v296 = vadd.s32 %v295, %v293
  %vm297 = vcmp.ge.s32.totalorder %v296, %v54
  %v298 = vsel %vm297, %v277, %v276
  %v299 = vor.u32 %v298, 262144
  %vm300 = vcmp.ge.s32.totalorder %v31, %v299
  %vm301 = vcmp.ge.s32.totalorder %v33, %v299
  %v302 = vsel %vm300, 1, 0
  %v303 = vsel %vm301, 1, 0
  %v304 = vsel %vm38, %v302, 0
  %v305 = vsel %vm38, %v303, 0
  %v306 = vadd.s32 %v304, %v305
  %v307 = vand.u32 %v306, 65535
  %v308 = vshrl.u32 %v306, 16
  %v309 = vcvt.s32.f32 %v307
  %v310 = vcvt.s32.f32 %v308
  %311 = vadd.xlane.f32.xlu0 %v309
  %v312 = vpop.xlane.xlu0 %311
  %313 = vadd.xlane.f32.xlu0 %v310
  %v314 = vpop.xlane.xlu0 %313
  %v315 = vcvt.f32.s32 %v312
  %v316 = vcvt.f32.s32 %v314
  %v317 = vshll.u32 %v316, 16
  %v318 = vadd.s32 %v317, %v315
  %vm319 = vcmp.ge.s32.totalorder %v318, %v54
  %v320 = vsel %vm319, %v299, %v298
  %v321 = vor.u32 %v320, 131072
  %vm322 = vcmp.ge.s32.totalorder %v31, %v321
  %vm323 = vcmp.ge.s32.totalorder %v33, %v321
  %v324 = vsel %vm322, 1, 0
  %v325 = vsel %vm323, 1, 0
  %v326 = vsel %vm38, %v324, 0
  %v327 = vsel %vm38, %v325, 0
  %v328 = vadd.s32 %v326, %v327
  %v329 = vand.u32 %v328, 65535
  %v330 = vshrl.u32 %v328, 16
  %v331 = vcvt.s32.f32 %v329
  %v332 = vcvt.s32.f32 %v330
  %333 = vadd.xlane.f32.xlu0 %v331
  %v334 = vpop.xlane.xlu0 %333
  %335 = vadd.xlane.f32.xlu0 %v332
  %v336 = vpop.xlane.xlu0 %335
  %v337 = vcvt.f32.s32 %v334
  %v338 = vcvt.f32.s32 %v336
  %v339 = vshll.u32 %v338, 16
  %v340 = vadd.s32 %v339, %v337
  %vm341 = vcmp.ge.s32.totalorder %v340, %v54
  %v342 = vsel %vm341, %v321, %v320
  %v343 = vor.u32 %v342, 65536
  %vm344 = vcmp.ge.s32.totalorder %v31, %v343
  %vm345 = vcmp.ge.s32.totalorder %v33, %v343
  %v346 = vsel %vm344, 1, 0
  %v347 = vsel %vm345, 1, 0
  %v348 = vsel %vm38, %v346, 0
  %v349 = vsel %vm38, %v347, 0
  %v350 = vadd.s32 %v348, %v349
  %v351 = vand.u32 %v350, 65535
  %v352 = vshrl.u32 %v350, 16
  %v353 = vcvt.s32.f32 %v351
  %v354 = vcvt.s32.f32 %v352
  %355 = vadd.xlane.f32.xlu0 %v353
  %v356 = vpop.xlane.xlu0 %355
  %357 = vadd.xlane.f32.xlu0 %v354
  %v358 = vpop.xlane.xlu0 %357
  %v359 = vcvt.f32.s32 %v356
  %v360 = vcvt.f32.s32 %v358
  %v361 = vshll.u32 %v360, 16
  %v362 = vadd.s32 %v361, %v359
  %vm363 = vcmp.ge.s32.totalorder %v362, %v54
  %v364 = vsel %vm363, %v343, %v342
  %v365 = vor.u32 %v364, 32768
  %vm366 = vcmp.ge.s32.totalorder %v31, %v365
  %vm367 = vcmp.ge.s32.totalorder %v33, %v365
  %v368 = vsel %vm366, 1, 0
  %v369 = vsel %vm367, 1, 0
  %v370 = vsel %vm38, %v368, 0
  %v371 = vsel %vm38, %v369, 0
  %v372 = vadd.s32 %v370, %v371
  %v373 = vand.u32 %v372, 65535
  %v374 = vshrl.u32 %v372, 16
  %v375 = vcvt.s32.f32 %v373
  %v376 = vcvt.s32.f32 %v374
  %377 = vadd.xlane.f32.xlu0 %v375
  %v378 = vpop.xlane.xlu0 %377
  %379 = vadd.xlane.f32.xlu0 %v376
  %v380 = vpop.xlane.xlu0 %379
  %v381 = vcvt.f32.s32 %v378
  %v382 = vcvt.f32.s32 %v380
  %v383 = vshll.u32 %v382, 16
  %v384 = vadd.s32 %v383, %v381
  %vm385 = vcmp.ge.s32.totalorder %v384, %v54
  %v386 = vsel %vm385, %v365, %v364
  %v387 = vor.u32 %v386, 16384
  %vm388 = vcmp.ge.s32.totalorder %v31, %v387
  %vm389 = vcmp.ge.s32.totalorder %v33, %v387
  %v390 = vsel %vm388, 1, 0
  %v391 = vsel %vm389, 1, 0
  %v392 = vsel %vm38, %v390, 0
  %v393 = vsel %vm38, %v391, 0
  %v394 = vadd.s32 %v392, %v393
  %v395 = vand.u32 %v394, 65535
  %v396 = vshrl.u32 %v394, 16
  %v397 = vcvt.s32.f32 %v395
  %v398 = vcvt.s32.f32 %v396
  %399 = vadd.xlane.f32.xlu0 %v397
  %v400 = vpop.xlane.xlu0 %399
  %401 = vadd.xlane.f32.xlu0 %v398
  %v402 = vpop.xlane.xlu0 %401
  %v403 = vcvt.f32.s32 %v400
  %v404 = vcvt.f32.s32 %v402
  %v405 = vshll.u32 %v404, 16
  %v406 = vadd.s32 %v405, %v403
  %vm407 = vcmp.ge.s32.totalorder %v406, %v54
  %v408 = vsel %vm407, %v387, %v386
  %v409 = vor.u32 %v408, 8192
  %vm410 = vcmp.ge.s32.totalorder %v31, %v409
  %vm411 = vcmp.ge.s32.totalorder %v33, %v409
  %v412 = vsel %vm410, 1, 0
  %v413 = vsel %vm411, 1, 0
  %v414 = vsel %vm38, %v412, 0
  %v415 = vsel %vm38, %v413, 0
  %v416 = vadd.s32 %v414, %v415
  %v417 = vand.u32 %v416, 65535
  %v418 = vshrl.u32 %v416, 16
  %v419 = vcvt.s32.f32 %v417
  %v420 = vcvt.s32.f32 %v418
  %421 = vadd.xlane.f32.xlu0 %v419
  %v422 = vpop.xlane.xlu0 %421
  %423 = vadd.xlane.f32.xlu0 %v420
  %v424 = vpop.xlane.xlu0 %423
  %v425 = vcvt.f32.s32 %v422
  %v426 = vcvt.f32.s32 %v424
  %v427 = vshll.u32 %v426, 16
  %v428 = vadd.s32 %v427, %v425
  %vm429 = vcmp.ge.s32.totalorder %v428, %v54
  %v430 = vsel %vm429, %v409, %v408
  %v431 = vor.u32 %v430, 4096
  %vm432 = vcmp.ge.s32.totalorder %v31, %v431
  %vm433 = vcmp.ge.s32.totalorder %v33, %v431
  %v434 = vsel %vm432, 1, 0
  %v435 = vsel %vm433, 1, 0
  %v436 = vsel %vm38, %v434, 0
  %v437 = vsel %vm38, %v435, 0
  %v438 = vadd.s32 %v436, %v437
  %v439 = vand.u32 %v438, 65535
  %v440 = vshrl.u32 %v438, 16
  %v441 = vcvt.s32.f32 %v439
  %v442 = vcvt.s32.f32 %v440
  %443 = vadd.xlane.f32.xlu0 %v441
  %v444 = vpop.xlane.xlu0 %443
  %445 = vadd.xlane.f32.xlu0 %v442
  %v446 = vpop.xlane.xlu0 %445
  %v447 = vcvt.f32.s32 %v444
  %v448 = vcvt.f32.s32 %v446
  %v449 = vshll.u32 %v448, 16
  %v450 = vadd.s32 %v449, %v447
  %vm451 = vcmp.ge.s32.totalorder %v450, %v54
  %v452 = vsel %vm451, %v431, %v430
  %v453 = vor.u32 %v452, 2048
  %vm454 = vcmp.ge.s32.totalorder %v31, %v453
  %vm455 = vcmp.ge.s32.totalorder %v33, %v453
  %v456 = vsel %vm454, 1, 0
  %v457 = vsel %vm455, 1, 0
  %v458 = vsel %vm38, %v456, 0
  %v459 = vsel %vm38, %v457, 0
  %v460 = vadd.s32 %v458, %v459
  %v461 = vand.u32 %v460, 65535
  %v462 = vshrl.u32 %v460, 16
  %v463 = vcvt.s32.f32 %v461
  %v464 = vcvt.s32.f32 %v462
  %465 = vadd.xlane.f32.xlu0 %v463
  %v466 = vpop.xlane.xlu0 %465
  %467 = vadd.xlane.f32.xlu0 %v464
  %v468 = vpop.xlane.xlu0 %467
  %v469 = vcvt.f32.s32 %v466
  %v470 = vcvt.f32.s32 %v468
  %v471 = vshll.u32 %v470, 16
  %v472 = vadd.s32 %v471, %v469
  %vm473 = vcmp.ge.s32.totalorder %v472, %v54
  %v474 = vsel %vm473, %v453, %v452
  %v475 = vor.u32 %v474, 1024
  %vm476 = vcmp.ge.s32.totalorder %v31, %v475
  %vm477 = vcmp.ge.s32.totalorder %v33, %v475
  %v478 = vsel %vm476, 1, 0
  %v479 = vsel %vm477, 1, 0
  %v480 = vsel %vm38, %v478, 0
  %v481 = vsel %vm38, %v479, 0
  %v482 = vadd.s32 %v480, %v481
  %v483 = vand.u32 %v482, 65535
  %v484 = vshrl.u32 %v482, 16
  %v485 = vcvt.s32.f32 %v483
  %v486 = vcvt.s32.f32 %v484
  %487 = vadd.xlane.f32.xlu0 %v485
  %v488 = vpop.xlane.xlu0 %487
  %489 = vadd.xlane.f32.xlu0 %v486
  %v490 = vpop.xlane.xlu0 %489
  %v491 = vcvt.f32.s32 %v488
  %v492 = vcvt.f32.s32 %v490
  %v493 = vshll.u32 %v492, 16
  %v494 = vadd.s32 %v493, %v491
  %vm495 = vcmp.ge.s32.totalorder %v494, %v54
  %v496 = vsel %vm495, %v475, %v474
  %v497 = vor.u32 %v496, 512
  %vm498 = vcmp.ge.s32.totalorder %v31, %v497
  %vm499 = vcmp.ge.s32.totalorder %v33, %v497
  %v500 = vsel %vm498, 1, 0
  %v501 = vsel %vm499, 1, 0
  %v502 = vsel %vm38, %v500, 0
  %v503 = vsel %vm38, %v501, 0
  %v504 = vadd.s32 %v502, %v503
  %v505 = vand.u32 %v504, 65535
  %v506 = vshrl.u32 %v504, 16
  %v507 = vcvt.s32.f32 %v505
  %v508 = vcvt.s32.f32 %v506
  %509 = vadd.xlane.f32.xlu0 %v507
  %v510 = vpop.xlane.xlu0 %509
  %511 = vadd.xlane.f32.xlu0 %v508
  %v512 = vpop.xlane.xlu0 %511
  %v513 = vcvt.f32.s32 %v510
  %v514 = vcvt.f32.s32 %v512
  %v515 = vshll.u32 %v514, 16
  %v516 = vadd.s32 %v515, %v513
  %vm517 = vcmp.ge.s32.totalorder %v516, %v54
  %v518 = vsel %vm517, %v497, %v496
  %v519 = vor.u32 %v518, 256
  %vm520 = vcmp.ge.s32.totalorder %v31, %v519
  %vm521 = vcmp.ge.s32.totalorder %v33, %v519
  %v522 = vsel %vm520, 1, 0
  %v523 = vsel %vm521, 1, 0
  %v524 = vsel %vm38, %v522, 0
  %v525 = vsel %vm38, %v523, 0
  %v526 = vadd.s32 %v524, %v525
  %v527 = vand.u32 %v526, 65535
  %v528 = vshrl.u32 %v526, 16
  %v529 = vcvt.s32.f32 %v527
  %v530 = vcvt.s32.f32 %v528
  %531 = vadd.xlane.f32.xlu0 %v529
  %v532 = vpop.xlane.xlu0 %531
  %533 = vadd.xlane.f32.xlu0 %v530
  %v534 = vpop.xlane.xlu0 %533
  %v535 = vcvt.f32.s32 %v532
  %v536 = vcvt.f32.s32 %v534
  %v537 = vshll.u32 %v536, 16
  %v538 = vadd.s32 %v537, %v535
  %vm539 = vcmp.ge.s32.totalorder %v538, %v54
  %v540 = vsel %vm539, %v519, %v518
  %v541 = vor.u32 %v540, 128
  %vm542 = vcmp.ge.s32.totalorder %v31, %v541
  %vm543 = vcmp.ge.s32.totalorder %v33, %v541
  %v544 = vsel %vm542, 1, 0
  %v545 = vsel %vm543, 1, 0
  %v546 = vsel %vm38, %v544, 0
  %v547 = vsel %vm38, %v545, 0
  %v548 = vadd.s32 %v546, %v547
  %v549 = vand.u32 %v548, 65535
  %v550 = vshrl.u32 %v548, 16
  %v551 = vcvt.s32.f32 %v549
  %v552 = vcvt.s32.f32 %v550
  %553 = vadd.xlane.f32.xlu0 %v551
  %v554 = vpop.xlane.xlu0 %553
  %555 = vadd.xlane.f32.xlu0 %v552
  %v556 = vpop.xlane.xlu0 %555
  %v557 = vcvt.f32.s32 %v554
  %v558 = vcvt.f32.s32 %v556
  %v559 = vshll.u32 %v558, 16
  %v560 = vadd.s32 %v559, %v557
  %vm561 = vcmp.ge.s32.totalorder %v560, %v54
  %v562 = vsel %vm561, %v541, %v540
  %v563 = vor.u32 %v562, 64
  %vm564 = vcmp.ge.s32.totalorder %v31, %v563
  %vm565 = vcmp.ge.s32.totalorder %v33, %v563
  %v566 = vsel %vm564, 1, 0
  %v567 = vsel %vm565, 1, 0
  %v568 = vsel %vm38, %v566, 0
  %v569 = vsel %vm38, %v567, 0
  %v570 = vadd.s32 %v568, %v569
  %v571 = vand.u32 %v570, 65535
  %v572 = vshrl.u32 %v570, 16
  %v573 = vcvt.s32.f32 %v571
  %v574 = vcvt.s32.f32 %v572
  %575 = vadd.xlane.f32.xlu0 %v573
  %v576 = vpop.xlane.xlu0 %575
  %577 = vadd.xlane.f32.xlu0 %v574
  %v578 = vpop.xlane.xlu0 %577
  %v579 = vcvt.f32.s32 %v576
  %v580 = vcvt.f32.s32 %v578
  %v581 = vshll.u32 %v580, 16
  %v582 = vadd.s32 %v581, %v579
  %vm583 = vcmp.ge.s32.totalorder %v582, %v54
  %v584 = vsel %vm583, %v563, %v562
  %v585 = vor.u32 %v584, 32
  %vm586 = vcmp.ge.s32.totalorder %v31, %v585
  %vm587 = vcmp.ge.s32.totalorder %v33, %v585
  %v588 = vsel %vm586, 1, 0
  %v589 = vsel %vm587, 1, 0
  %v590 = vsel %vm38, %v588, 0
  %v591 = vsel %vm38, %v589, 0
  %v592 = vadd.s32 %v590, %v591
  %v593 = vand.u32 %v592, 65535
  %v594 = vshrl.u32 %v592, 16
  %v595 = vcvt.s32.f32 %v593
  %v596 = vcvt.s32.f32 %v594
  %597 = vadd.xlane.f32.xlu0 %v595
  %v598 = vpop.xlane.xlu0 %597
  %599 = vadd.xlane.f32.xlu0 %v596
  %v600 = vpop.xlane.xlu0 %599
  %v601 = vcvt.f32.s32 %v598
  %v602 = vcvt.f32.s32 %v600
  %v603 = vshll.u32 %v602, 16
  %v604 = vadd.s32 %v603, %v601
  %vm605 = vcmp.ge.s32.totalorder %v604, %v54
  %v606 = vsel %vm605, %v585, %v584
  %v607 = vor.u32 %v606, 16
  %vm608 = vcmp.ge.s32.totalorder %v31, %v607
  %vm609 = vcmp.ge.s32.totalorder %v33, %v607
  %v610 = vsel %vm608, 1, 0
  %v611 = vsel %vm609, 1, 0
  %v612 = vsel %vm38, %v610, 0
  %v613 = vsel %vm38, %v611, 0
  %v614 = vadd.s32 %v612, %v613
  %v615 = vand.u32 %v614, 65535
  %v616 = vshrl.u32 %v614, 16
  %v617 = vcvt.s32.f32 %v615
  %v618 = vcvt.s32.f32 %v616
  %619 = vadd.xlane.f32.xlu0 %v617
  %v620 = vpop.xlane.xlu0 %619
  %621 = vadd.xlane.f32.xlu0 %v618
  %v622 = vpop.xlane.xlu0 %621
  %v623 = vcvt.f32.s32 %v620
  %v624 = vcvt.f32.s32 %v622
  %v625 = vshll.u32 %v624, 16
  %v626 = vadd.s32 %v625, %v623
  %vm627 = vcmp.ge.s32.totalorder %v626, %v54
  %v628 = vsel %vm627, %v607, %v606
  %v629 = vor.u32 %v628, 8
  %vm630 = vcmp.ge.s32.totalorder %v31, %v629
  %vm631 = vcmp.ge.s32.totalorder %v33, %v629
  %v632 = vsel %vm630, 1, 0
  %v633 = vsel %vm631, 1, 0
  %v634 = vsel %vm38, %v632, 0
  %v635 = vsel %vm38, %v633, 0
  %v636 = vadd.s32 %v634, %v635
  %v637 = vand.u32 %v636, 65535
  %v638 = vshrl.u32 %v636, 16
  %v639 = vcvt.s32.f32 %v637
  %v640 = vcvt.s32.f32 %v638
  %641 = vadd.xlane.f32.xlu0 %v639
  %v642 = vpop.xlane.xlu0 %641
  %643 = vadd.xlane.f32.xlu0 %v640
  %v644 = vpop.xlane.xlu0 %643
  %v645 = vcvt.f32.s32 %v642
  %v646 = vcvt.f32.s32 %v644
  %v647 = vshll.u32 %v646, 16
  %v648 = vadd.s32 %v647, %v645
  %vm649 = vcmp.ge.s32.totalorder %v648, %v54
  %v650 = vsel %vm649, %v629, %v628
  %v651 = vor.u32 %v650, 4
  %vm652 = vcmp.ge.s32.totalorder %v31, %v651
  %vm653 = vcmp.ge.s32.totalorder %v33, %v651
  %v654 = vsel %vm652, 1, 0
  %v655 = vsel %vm653, 1, 0
  %v656 = vsel %vm38, %v654, 0
  %v657 = vsel %vm38, %v655, 0
  %v658 = vadd.s32 %v656, %v657
  %v659 = vand.u32 %v658, 65535
  %v660 = vshrl.u32 %v658, 16
  %v661 = vcvt.s32.f32 %v659
  %v662 = vcvt.s32.f32 %v660
  %663 = vadd.xlane.f32.xlu0 %v661
  %v664 = vpop.xlane.xlu0 %663
  %665 = vadd.xlane.f32.xlu0 %v662
  %v666 = vpop.xlane.xlu0 %665
  %v667 = vcvt.f32.s32 %v664
  %v668 = vcvt.f32.s32 %v666
  %v669 = vshll.u32 %v668, 16
  %v670 = vadd.s32 %v669, %v667
  %vm671 = vcmp.ge.s32.totalorder %v670, %v54
  %v672 = vsel %vm671, %v651, %v650
  %v673 = vor.u32 %v672, 2
  %vm674 = vcmp.ge.s32.totalorder %v31, %v673
  %vm675 = vcmp.ge.s32.totalorder %v33, %v673
  %v676 = vsel %vm674, 1, 0
  %v677 = vsel %vm675, 1, 0
  %v678 = vsel %vm38, %v676, 0
  %v679 = vsel %vm38, %v677, 0
  %v680 = vadd.s32 %v678, %v679
  %v681 = vand.u32 %v680, 65535
  %v682 = vshrl.u32 %v680, 16
  %v683 = vcvt.s32.f32 %v681
  %v684 = vcvt.s32.f32 %v682
  %685 = vadd.xlane.f32.xlu0 %v683
  %v686 = vpop.xlane.xlu0 %685
  %687 = vadd.xlane.f32.xlu0 %v684
  %v688 = vpop.xlane.xlu0 %687
  %v689 = vcvt.f32.s32 %v686
  %v690 = vcvt.f32.s32 %v688
  %v691 = vshll.u32 %v690, 16
  %v692 = vadd.s32 %v691, %v689
  %vm693 = vcmp.ge.s32.totalorder %v692, %v54
  %v694 = vsel %vm693, %v673, %v672
  %v695 = vor.u32 %v694, 1
  %vm696 = vcmp.ge.s32.totalorder %v31, %v695
  %vm697 = vcmp.ge.s32.totalorder %v33, %v695
  %v698 = vsel %vm696, 1, 0
  %v699 = vsel %vm697, 1, 0
  %v700 = vsel %vm38, %v698, 0
  %v701 = vsel %vm38, %v699, 0
  %v702 = vadd.s32 %v700, %v701
  %v703 = vand.u32 %v702, 65535
  %v704 = vshrl.u32 %v702, 16
  %v705 = vcvt.s32.f32 %v703
  %v706 = vcvt.s32.f32 %v704
  %707 = vadd.xlane.f32.xlu0 %v705
  %v708 = vpop.xlane.xlu0 %707
  %709 = vadd.xlane.f32.xlu0 %v706
  %v710 = vpop.xlane.xlu0 %709
  %v711 = vcvt.f32.s32 %v708
  %v712 = vcvt.f32.s32 %v710
  %v713 = vshll.u32 %v712, 16
  %v714 = vadd.s32 %v713, %v711
  %vm715 = vcmp.ge.s32.totalorder %v714, %v54
  %v716 = vsel %vm715, %v695, %v694
  %vm717 = vcmp.eq.f32.partialorder %v14, -inf
  %vm718 = vcmp.ge.s32.totalorder %v31, %v716
  %vm719 = vcmp.ge.s32.totalorder %v33, %v716
  %v720 = vsel %vm718, 1, 0
  %v721 = vsel %vm719, 1, 0
  %v722 = vcombine.low %v720, %v721
  %v724 = vunpack.c.l.s4 1983009808
  %v725 = vunpack.c.0.s8 %v724
  %v726 = vlaneseq
  %v727 = vshrl.u32 %v726, 7
  %v728 = vsub.s32 %v725, %v727
  %v729 = vrot.slane %v722, %v728
  %vm730 = vcmp.ne.s32.totalorder %v729, 0
  %vm731 = vmor %vm717, %vm730
  %v732 = vld [vmem:[%s2] sm:$0xf]
  %v733 = vsel %vm731, %v732, 0.0
  %v736 = vunpack.c.l.s4 1983009808
  %v737 = vunpack.c.0.s8 %v736
  %v738 = vlaneseq
  %v739 = vshrl.u32 %v738, 7
  %v740 = vsub.s32 %v737, %v739
  %v741 = vrot.slane %v733, %v740
  %v742 = vcombine.high %v741, %v741
  %v745 = vsel %vm38, %v741, 0.0
  %v746 = vsel %vm38, %v742, 0.0
  %v747 = vadd.f32 %v745, %v746
  %748 = vadd.xlane.f32.xlu0 %v747
  %v749 = vpop.xlane.xlu0 %748
  %v750 = vrot.slane %v749, 4
  %v751 = vadd.f32 %v749, %v750
  %v752 = vrot.slane %v751, 2
  %v753 = vadd.f32 %v751, %v752
  %v754 = vrot.slane %v753, 1
  %v755 = vadd.f32 %v753, %v754
  %s756 = vtos %v755
  %v757 = vlaneseq
  %v758 = vshrl.u32 %v757, 7
  %v759 = vlaneseq
  %v760 = vand.u32 %v759, 127
  %vm761 = vcmp.eq.s32.totalorder %v758, 0
  %vm762 = vcmp.eq.s32.totalorder %v760, 0
  %vm763 = vmand %vm761, %vm762
  %v764 = vstv %s756
  %v765 = vsel %vm763, %v764, 0.0
  %766 = vst [vmem:[%s3] sm:$0xff] %v765
  // Predicated region
  $region10: #{multibox_loss_v2.3} parent=0 // pred_check
    _
  $region11: #{multibox_loss_v2.3} parent=0 // pred_check_branch
    %768 = sbr.rel (0) target = $region13
  $region12: #{multibox_loss_v2.3} parent=0 // pred_region
    _
  $region13: #{multibox_loss_v2.3} parent=0 // pred_fallthru
    _
  // Predicated region
  $region14: #{multibox_loss_v2.3} parent=0 // pred_check
    _
  $region15: #{multibox_loss_v2.3} parent=0 // pred_check_branch
    %770 = sbr.rel (0) target = $region17
  $region16: #{multibox_loss_v2.3} parent=0 // pred_region
    _
  $region17: #{multibox_loss_v2.3} parent=0 // pred_fallthru
    _

</llo_original>
